<compile_context>
chip_gen: v7x
topology: tpu7x:2x2x1
jax: 0.10.0
libtpu: 0.0.40
codegen_flags: <defaults>
</compile_context>

<pallas_src>
import functools

import jax
import jax.numpy as jnp
from jax import lax
from jax.experimental import pallas as pl
from jax.experimental.pallas import tpu as pltpu

# ----------------------------- model config ---------------------------------
B = 2           # batch
S = 16          # sequence length
DIM = 32        # query_dim == inner_dim (to_out[0].weight.shape[1])
HEADS = 4
HEAD_DIM = DIM // HEADS
RANK = 8        # eraser_rank


# ----------------------------- kernel ----------------------------------------
def _attn_eraser_kernel(x_ref, w_ref, p_ref, o_ref, *, nb, seq, heads,
                        head_dim, rank):
    """One grid step handles `nb` batches (nb*seq rows).

    x_ref : (nb*S, DIM) f32
    w_ref : (DIM, 4*DIM) bf16   -> [Wq*scale | Wk | Wv | Wo] column blocks
    p_ref : (pad, DIM)  f32     -> [W_down ; W_up ; b_out ; b_down ; b_up]
    """
    dim = heads * head_dim
    x = x_ref[...].astype(jnp.bfloat16)                       # (nb*S, DIM)
    w = w_ref[...]                                            # (DIM, 4*DIM) bf16

    # One fused projection: columns [0:DIM)=Q, [DIM:2DIM)=K, [2DIM:3DIM)=V.
    # Columns [3DIM:4DIM) are x @ Wo, unused — free on a 256-wide MXU.
    qkv = jnp.dot(x, w, preferred_element_type=jnp.float32).astype(jnp.bfloat16)

    dn = (((1,), (1,)), ((), ()))                             # q @ k^T (no .T)

    # All (batch, head) score matrices, stacked on sublanes -> one softmax pass.
    scores = []
    for b in range(nb):                                       # static unroll
        rows = slice(b * seq, (b + 1) * seq)                  # 8-aligned sublanes
        for h in range(heads):
            q_h = qkv[rows, h * head_dim:(h + 1) * head_dim]            # (S, d)
            k_h = qkv[rows, dim + h * head_dim:dim + (h + 1) * head_dim]
            scores.append(lax.dot_general(q_h, k_h, dn,
                                          preferred_element_type=jnp.float32))
    s_all = jnp.concatenate(scores, axis=0) if len(scores) > 1 else scores[0]
    s_all = s_all - jnp.max(s_all, axis=-1, keepdims=True)    # (nb*H*S, S) f32
    p_all = jnp.exp(s_all)
    p_all = p_all * pl.reciprocal(jnp.sum(p_all, axis=-1, keepdims=True),
                                  approx=True)
    p_all = p_all.astype(jnp.bfloat16)

    # P @ V and to_out[0], folded per head:
    #   ctx @ Wo == sum_h pv_h @ Wo[h*d:(h+1)*d, :]   (no lane concat of heads)
    outs = []
    for b in range(nb):
        rows = slice(b * seq, (b + 1) * seq)
        acc = jnp.zeros((seq, dim), jnp.float32)
        for h in range(heads):
            idx = b * heads + h
            p_h = p_all[idx * seq:(idx + 1) * seq, :]                       # (S, S)
            v_h = qkv[rows, 2 * dim + h * head_dim:2 * dim + (h + 1) * head_dim]
            pv = jnp.dot(p_h, v_h, preferred_element_type=jnp.float32)      # (S, d)
            wo_h = w[h * head_dim:(h + 1) * head_dim, 3 * dim:4 * dim]      # (d, DIM)
            acc = acc + jnp.dot(pv.astype(jnp.bfloat16), wo_h,
                                preferred_element_type=jnp.float32)
        outs.append(acc)
    attn = jnp.concatenate(outs, axis=0) if nb > 1 else outs[0]   # (nb*S, DIM)

    # Small f32 param slab, static sub-slices.
    p = p_ref[...]
    wd = p[0:dim, 0:rank]                                     # (DIM, RANK)
    wu = p[dim:dim + rank, :]                                 # (RANK, DIM)
    bo = p[dim + rank:dim + rank + 1, :]                      # (1, DIM)
    bd = p[dim + rank + 1:dim + rank + 2, 0:rank]             # (1, RANK)
    bu = p[dim + rank + 2:dim + rank + 3, :]                  # (1, DIM)

    attn_out = attn + bo                                      # (nb*S, DIM) f32

    # AdapterEraser: up(GELU(down(attn_out))) + attn_out  (exact/erf GELU)
    h1 = jnp.dot(attn_out.astype(jnp.bfloat16), wd.astype(jnp.bfloat16),
                 preferred_element_type=jnp.float32) + bd
    g = 0.5 * h1 * (1.0 + lax.erf(h1 * jnp.float32(0.7071067811865476)))
    up = jnp.dot(g.astype(jnp.bfloat16), wu.astype(jnp.bfloat16),
                 preferred_element_type=jnp.float32) + bu

    o_ref[...] = attn_out + up


# ----------------------------- param packing (hoisted, one-time) -------------
def pack_params(params, heads=HEADS):
    """Pack module parameters into kernel-friendly slabs.  Call ONCE, outside
    the per-call path (the reshapes/concats/casts are not re-traced per call)."""
    wq, wk, wv, wo, bo, wd, bd, wu, bu = params
    dim = wq.shape[0]
    head_dim = dim // heads
    rank = wd.shape[1]
    scale = 1.0 / jnp.sqrt(jnp.float32(head_dim))

    # bf16 MXU weight slab: [Wq*scale | Wk | Wv | Wo] -> (DIM, 4*DIM), lane-dense.
    w_slab = jnp.concatenate([wq * scale, wk, wv, wo], axis=1).astype(jnp.bfloat16)

    # f32 elementwise/adapter slab, padded to a multiple of 8 sublanes.
    rows = dim + rank + 3
    pad = (-rows) % 8
    p_slab = jnp.concatenate([
        jnp.pad(wd, ((0, 0), (0, dim - rank))),     # rows [0, dim)        : W_down
        wu,                                          # rows [dim, dim+rank) : W_up
        bo,                                          # row dim+rank         : b_out
        jnp.pad(bd, ((0, 0), (0, dim - rank))),     # row dim+rank+1       : b_down
        bu,                                          # row dim+rank+2       : b_up
        jnp.zeros((pad, dim), jnp.float32),
    ], axis=0)
    return (w_slab, p_slab, heads, head_dim, rank)


def _has_two_tensorcores():
    # v7x has 2 TensorCores per chip; re-split the batch across them there.
    try:
        kind = jax.devices()[0].device_kind.lower()
        return ("v7" in kind) or ("7x" in kind)
    except Exception:
        return False


# ----------------------------- wrapper ----------------------------------------
def attention_with_eraser(x, packed, *, batch_grid=None):
    w_slab, p_slab, heads, head_dim, rank = packed
    b, s, dim = x.shape
    if batch_grid is None:
        batch_grid = _has_two_tensorcores()
    nb = 1 if batch_grid else b            # batches per grid step
    grid = (b // nb,)
    rows = nb * s

    kernel = functools.partial(_attn_eraser_kernel, nb=nb, seq=s,
                               heads=heads, head_dim=head_dim, rank=rank)
    x2 = x.reshape(b * s, dim)

    out = pl.pallas_call(
        kernel,
        out_shape=jax.ShapeDtypeStruct((b * s, dim), jnp.float32),
        grid_spec=pltpu.PrefetchScalarGridSpec(
            num_scalar_prefetch=0,
            grid=grid,
            in_specs=[
                pl.BlockSpec((rows, dim), lambda i: (i, 0)),     # x (flattened)
                pl.BlockSpec(w_slab.shape, lambda i: (0, 0)),    # bf16 weight slab
                pl.BlockSpec(p_slab.shape, lambda i: (0, 0)),    # f32 bias/adapter slab
            ],
            out_specs=pl.BlockSpec((rows, dim), lambda i: (i, 0)),
        ),
        compiler_params=pltpu.CompilerParams(
            dimension_semantics=(("parallel",) if batch_grid else ("arbitrary",))),
    )(x2, w_slab, p_slab)
    return out.reshape(b, s, dim)


# ----------------------------- reference (plain JAX) -------------------------
def reference(x, params):
    (wq, wk, wv, wo, bo, wd, bd, wu, bu) = params
    b, s, dim = x.shape
    q = (x @ wq).reshape(b, s, HEADS, HEAD_DIM).transpose(0, 2, 1, 3)
    k = (x @ wk).reshape(b, s, HEADS, HEAD_DIM).transpose(0, 2, 1, 3)
    v = (x @ wv).reshape(b, s, HEADS, HEAD_DIM).transpose(0, 2, 1, 3)
    sc = jnp.einsum("bhqd,bhkd->bhqk", q, k) / jnp.sqrt(jnp.float32(HEAD_DIM))
    p = jax.nn.softmax(sc, axis=-1)
    ctx = jnp.einsum("bhqk,bhkd->bhqd", p, v).transpose(0, 2, 1, 3).reshape(b, s, dim)
    attn_out = ctx @ wo + bo
    adapt = jax.nn.gelu(attn_out @ wd + bd, approximate=False) @ wu + bu
    return attn_out + adapt


# ----------------------------- params ---------------------------------------
def init_params(key):
    ks = jax.random.split(key, 7)
    def lin(k, fan_in, shape):
        bound = 1.0 / jnp.sqrt(fan_in)
        return jax.random.uniform(k, shape, jnp.float32, -bound, bound)
    wq = lin(ks[0], DIM, (DIM, DIM))
    wk = lin(ks[1], DIM, (DIM, DIM))
    wv = lin(ks[2], DIM, (DIM, DIM))
    wo = lin(ks[3], DIM, (DIM, DIM))
    bo = lin(ks[4], DIM, (1, DIM))
    wd = lin(ks[5], DIM, (DIM, RANK))
    bd = lin(ks[6], DIM, (1, RANK))
    wu = jnp.zeros((RANK, DIM), jnp.float32)   # zero_module(nn.Linear(mid_dim, dim))
    bu = jnp.zeros((1, DIM), jnp.float32)
    return (wq, wk, wv, wo, bo, wd, bd, wu, bu)


if __name__ == "__main__":
    key = jax.random.PRNGKey(0)
    kx, kp = jax.random.split(key)
    x = jax.random.normal(kx, (B, S, DIM), jnp.float32)
    params = init_params(kp)

    packed = pack_params(params)               # hoisted one-time packing
    out = attention_with_eraser(x, packed)
    out = jax.block_until_ready(out)

    ref = reference(x, params)
    assert out.shape == (B, S, DIM)
    # 5e-3 tolerance: bf16 MXU operands (f32 accumulation), the trace-time
    # 1/sqrt(d) fold, and pl.reciprocal(approx=True) in the softmax denominator
    # perturb results slightly vs. the exact f32 reference.
    assert jnp.allclose(out, ref, atol=5e-3, rtol=5e-3), \
        f"max abs err {jnp.max(jnp.abs(out - ref))}"
    print("KERNEL_OK")
</pallas_src>

<mosaic_0001>
module attributes {stable_mosaic.version = 11 : i64} {
  func.func @_attn_eraser_kernel(%arg0: i32, %arg1: memref<32x32xf32, #tpu.memory_space<vmem>>, %arg2: memref<32x128xbf16, #tpu.memory_space<vmem>>, %arg3: memref<48x32xf32, #tpu.memory_space<vmem>>, %arg4: memref<32x32xf32, #tpu.memory_space<vmem>>) attributes {dimension_semantics = [#tpu.dimension_semantics<arbitrary>], iteration_bounds = array<i64: 1>, scalar_prefetch = 0 : i64, scratch_operands = 0 : i64, tpu.core_type = #tpu.core_type<tc>, window_params = [{transform_indices = @transform_0, window_bounds = array<i64: 32, 32>}, {pipeline_mode = #tpu.pipeline_mode<synchronous>, transform_indices = @transform_1, window_bounds = array<i64: 32, 128>}, {pipeline_mode = #tpu.pipeline_mode<synchronous>, transform_indices = @transform_2, window_bounds = array<i64: 48, 32>}, {transform_indices = @transform_3, window_bounds = array<i64: 32, 32>}]} {
    %c0 = arith.constant 0 : index
    %c0_0 = arith.constant 0 : index
    %0 = vector.load %arg1[%c0, %c0_0] : memref<32x32xf32, #tpu.memory_space<vmem>>, vector<32x32xf32>
    %1 = arith.truncf %0 : vector<32x32xf32> to vector<32x32xbf16>
    %c0_1 = arith.constant 0 : index
    %c0_2 = arith.constant 0 : index
    %2 = vector.load %arg2[%c0_1, %c0_2] : memref<32x128xbf16, #tpu.memory_space<vmem>>, vector<32x128xbf16>
    %cst = arith.constant dense<0.000000e+00> : vector<32x128xf32>
    %3 = tpu.matmul %1, %2, %cst {dimension_numbers = #tpu.dot_dimension_numbers<[1], [0], [0], [1], [0, 0, 1, 1], [], []>} : vector<32x32xbf16>, vector<32x128xbf16>, vector<32x128xf32> -> vector<32x128xf32>
    %4 = arith.truncf %3 : vector<32x128xf32> to vector<32x128xbf16>
    %5 = vector.extract_strided_slice %4 {offsets = [0, 0], sizes = [16, 8], strides = [1, 1]} : vector<32x128xbf16> to vector<16x8xbf16>
    %6 = vector.extract_strided_slice %4 {offsets = [0, 32], sizes = [16, 8], strides = [1, 1]} : vector<32x128xbf16> to vector<16x8xbf16>
    %cst_3 = arith.constant dense<0.000000e+00> : vector<16x16xf32>
    %7 = tpu.matmul %5, %6, %cst_3 {dimension_numbers = #tpu.dot_dimension_numbers<[1], [1], [0], [0], [0, 0, 1, 0], [], []>} : vector<16x8xbf16>, vector<16x8xbf16>, vector<16x16xf32> -> vector<16x16xf32>
    %8 = vector.extract_strided_slice %4 {offsets = [0, 8], sizes = [16, 8], strides = [1, 1]} : vector<32x128xbf16> to vector<16x8xbf16>
    %9 = vector.extract_strided_slice %4 {offsets = [0, 40], sizes = [16, 8], strides = [1, 1]} : vector<32x128xbf16> to vector<16x8xbf16>
    %cst_4 = arith.constant dense<0.000000e+00> : vector<16x16xf32>
    %10 = tpu.matmul %8, %9, %cst_4 {dimension_numbers = #tpu.dot_dimension_numbers<[1], [1], [0], [0], [0, 0, 1, 0], [], []>} : vector<16x8xbf16>, vector<16x8xbf16>, vector<16x16xf32> -> vector<16x16xf32>
    %11 = vector.extract_strided_slice %4 {offsets = [0, 16], sizes = [16, 8], strides = [1, 1]} : vector<32x128xbf16> to vector<16x8xbf16>
    %12 = vector.extract_strided_slice %4 {offsets = [0, 48], sizes = [16, 8], strides = [1, 1]} : vector<32x128xbf16> to vector<16x8xbf16>
    %cst_5 = arith.constant dense<0.000000e+00> : vector<16x16xf32>
    %13 = tpu.matmul %11, %12, %cst_5 {dimension_numbers = #tpu.dot_dimension_numbers<[1], [1], [0], [0], [0, 0, 1, 0], [], []>} : vector<16x8xbf16>, vector<16x8xbf16>, vector<16x16xf32> -> vector<16x16xf32>
    %14 = vector.extract_strided_slice %4 {offsets = [0, 24], sizes = [16, 8], strides = [1, 1]} : vector<32x128xbf16> to vector<16x8xbf16>
    %15 = vector.extract_strided_slice %4 {offsets = [0, 56], sizes = [16, 8], strides = [1, 1]} : vector<32x128xbf16> to vector<16x8xbf16>
    %cst_6 = arith.constant dense<0.000000e+00> : vector<16x16xf32>
    %16 = tpu.matmul %14, %15, %cst_6 {dimension_numbers = #tpu.dot_dimension_numbers<[1], [1], [0], [0], [0, 0, 1, 0], [], []>} : vector<16x8xbf16>, vector<16x8xbf16>, vector<16x16xf32> -> vector<16x16xf32>
    %17 = vector.extract_strided_slice %4 {offsets = [16, 0], sizes = [16, 8], strides = [1, 1]} : vector<32x128xbf16> to vector<16x8xbf16>
    %18 = vector.extract_strided_slice %4 {offsets = [16, 32], sizes = [16, 8], strides = [1, 1]} : vector<32x128xbf16> to vector<16x8xbf16>
    %cst_7 = arith.constant dense<0.000000e+00> : vector<16x16xf32>
    %19 = tpu.matmul %17, %18, %cst_7 {dimension_numbers = #tpu.dot_dimension_numbers<[1], [1], [0], [0], [0, 0, 1, 0], [], []>} : vector<16x8xbf16>, vector<16x8xbf16>, vector<16x16xf32> -> vector<16x16xf32>
    %20 = vector.extract_strided_slice %4 {offsets = [16, 8], sizes = [16, 8], strides = [1, 1]} : vector<32x128xbf16> to vector<16x8xbf16>
    %21 = vector.extract_strided_slice %4 {offsets = [16, 40], sizes = [16, 8], strides = [1, 1]} : vector<32x128xbf16> to vector<16x8xbf16>
    %cst_8 = arith.constant dense<0.000000e+00> : vector<16x16xf32>
    %22 = tpu.matmul %20, %21, %cst_8 {dimension_numbers = #tpu.dot_dimension_numbers<[1], [1], [0], [0], [0, 0, 1, 0], [], []>} : vector<16x8xbf16>, vector<16x8xbf16>, vector<16x16xf32> -> vector<16x16xf32>
    %23 = vector.extract_strided_slice %4 {offsets = [16, 16], sizes = [16, 8], strides = [1, 1]} : vector<32x128xbf16> to vector<16x8xbf16>
    %24 = vector.extract_strided_slice %4 {offsets = [16, 48], sizes = [16, 8], strides = [1, 1]} : vector<32x128xbf16> to vector<16x8xbf16>
    %cst_9 = arith.constant dense<0.000000e+00> : vector<16x16xf32>
    %25 = tpu.matmul %23, %24, %cst_9 {dimension_numbers = #tpu.dot_dimension_numbers<[1], [1], [0], [0], [0, 0, 1, 0], [], []>} : vector<16x8xbf16>, vector<16x8xbf16>, vector<16x16xf32> -> vector<16x16xf32>
    %26 = vector.extract_strided_slice %4 {offsets = [16, 24], sizes = [16, 8], strides = [1, 1]} : vector<32x128xbf16> to vector<16x8xbf16>
    %27 = vector.extract_strided_slice %4 {offsets = [16, 56], sizes = [16, 8], strides = [1, 1]} : vector<32x128xbf16> to vector<16x8xbf16>
    %cst_10 = arith.constant dense<0.000000e+00> : vector<16x16xf32>
    %28 = tpu.matmul %26, %27, %cst_10 {dimension_numbers = #tpu.dot_dimension_numbers<[1], [1], [0], [0], [0, 0, 1, 0], [], []>} : vector<16x8xbf16>, vector<16x8xbf16>, vector<16x16xf32> -> vector<16x16xf32>
    %29 = tpu.concatenate %7, %10, %13, %16, %19, %22, %25, %28 in 0 : vector<16x16xf32>, vector<16x16xf32>, vector<16x16xf32>, vector<16x16xf32>, vector<16x16xf32>, vector<16x16xf32>, vector<16x16xf32>, vector<16x16xf32> -> vector<128x16xf32>
    %cst_11 = arith.constant dense<0xFF800000> : vector<128xf32>
    %30 = vector.multi_reduction <maximumf>, %29, %cst_11 [1] : vector<128x16xf32> to vector<128xf32>
    %31 = vector.shape_cast %30 : vector<128xf32> to vector<128x1xf32>
    %32 = vector.broadcast %31 : vector<128x1xf32> to vector<128x16xf32>
    %33 = arith.subf %29, %32 : vector<128x16xf32>
    %34 = math.exp %33 : vector<128x16xf32>
    %cst_12 = arith.constant dense<0.000000e+00> : vector<128xf32>
    %35 = vector.multi_reduction <add>, %34, %cst_12 [1] : vector<128x16xf32> to vector<128xf32>
    %36 = vector.shape_cast %35 : vector<128xf32> to vector<128x1xf32>
    %37 = tpu.reciprocal %36 {approx = true} : vector<128x1xf32> -> vector<128x1xf32>
    %38 = vector.broadcast %37 : vector<128x1xf32> to vector<128x16xf32>
    %39 = arith.mulf %34, %38 : vector<128x16xf32>
    %40 = arith.truncf %39 : vector<128x16xf32> to vector<128x16xbf16>
    %cst_13 = arith.constant 0.000000e+00 : f32
    %41 = vector.broadcast %cst_13 : f32 to vector<16x32xf32>
    %42 = vector.extract_strided_slice %40 {offsets = [0, 0], sizes = [16, 16], strides = [1, 1]} : vector<128x16xbf16> to vector<16x16xbf16>
    %43 = vector.extract_strided_slice %4 {offsets = [0, 64], sizes = [16, 8], strides = [1, 1]} : vector<32x128xbf16> to vector<16x8xbf16>
    %cst_14 = arith.constant dense<0.000000e+00> : vector<16x8xf32>
    %44 = tpu.matmul %42, %43, %cst_14 {dimension_numbers = #tpu.dot_dimension_numbers<[1], [0], [0], [1], [0, 0, 1, 1], [], []>} : vector<16x16xbf16>, vector<16x8xbf16>, vector<16x8xf32> -> vector<16x8xf32>
    %45 = vector.extract_strided_slice %2 {offsets = [0, 96], sizes = [8, 32], strides = [1, 1]} : vector<32x128xbf16> to vector<8x32xbf16>
    %46 = arith.truncf %44 : vector<16x8xf32> to vector<16x8xbf16>
    %cst_15 = arith.constant dense<0.000000e+00> : vector<16x32xf32>
    %47 = tpu.matmul %46, %45, %cst_15 {dimension_numbers = #tpu.dot_dimension_numbers<[1], [0], [0], [1], [0, 0, 1, 1], [], []>} : vector<16x8xbf16>, vector<8x32xbf16>, vector<16x32xf32> -> vector<16x32xf32>
    %48 = arith.addf %41, %47 : vector<16x32xf32>
    %49 = vector.extract_strided_slice %40 {offsets = [16, 0], sizes = [16, 16], strides = [1, 1]} : vector<128x16xbf16> to vector<16x16xbf16>
    %50 = vector.extract_strided_slice %4 {offsets = [0, 72], sizes = [16, 8], strides = [1, 1]} : vector<32x128xbf16> to vector<16x8xbf16>
    %cst_16 = arith.constant dense<0.000000e+00> : vector<16x8xf32>
    %51 = tpu.matmul %49, %50, %cst_16 {dimension_numbers = #tpu.dot_dimension_numbers<[1], [0], [0], [1], [0, 0, 1, 1], [], []>} : vector<16x16xbf16>, vector<16x8xbf16>, vector<16x8xf32> -> vector<16x8xf32>
    %52 = vector.extract_strided_slice %2 {offsets = [8, 96], sizes = [8, 32], strides = [1, 1]} : vector<32x128xbf16> to vector<8x32xbf16>
    %53 = arith.truncf %51 : vector<16x8xf32> to vector<16x8xbf16>
    %cst_17 = arith.constant dense<0.000000e+00> : vector<16x32xf32>
    %54 = tpu.matmul %53, %52, %cst_17 {dimension_numbers = #tpu.dot_dimension_numbers<[1], [0], [0], [1], [0, 0, 1, 1], [], []>} : vector<16x8xbf16>, vector<8x32xbf16>, vector<16x32xf32> -> vector<16x32xf32>
    %55 = arith.addf %48, %54 : vector<16x32xf32>
    %56 = vector.extract_strided_slice %40 {offsets = [32, 0], sizes = [16, 16], strides = [1, 1]} : vector<128x16xbf16> to vector<16x16xbf16>
    %57 = vector.extract_strided_slice %4 {offsets = [0, 80], sizes = [16, 8], strides = [1, 1]} : vector<32x128xbf16> to vector<16x8xbf16>
    %cst_18 = arith.constant dense<0.000000e+00> : vector<16x8xf32>
    %58 = tpu.matmul %56, %57, %cst_18 {dimension_numbers = #tpu.dot_dimension_numbers<[1], [0], [0], [1], [0, 0, 1, 1], [], []>} : vector<16x16xbf16>, vector<16x8xbf16>, vector<16x8xf32> -> vector<16x8xf32>
    %59 = vector.extract_strided_slice %2 {offsets = [16, 96], sizes = [8, 32], strides = [1, 1]} : vector<32x128xbf16> to vector<8x32xbf16>
    %60 = arith.truncf %58 : vector<16x8xf32> to vector<16x8xbf16>
    %cst_19 = arith.constant dense<0.000000e+00> : vector<16x32xf32>
    %61 = tpu.matmul %60, %59, %cst_19 {dimension_numbers = #tpu.dot_dimension_numbers<[1], [0], [0], [1], [0, 0, 1, 1], [], []>} : vector<16x8xbf16>, vector<8x32xbf16>, vector<16x32xf32> -> vector<16x32xf32>
    %62 = arith.addf %55, %61 : vector<16x32xf32>
    %63 = vector.extract_strided_slice %40 {offsets = [48, 0], sizes = [16, 16], strides = [1, 1]} : vector<128x16xbf16> to vector<16x16xbf16>
    %64 = vector.extract_strided_slice %4 {offsets = [0, 88], sizes = [16, 8], strides = [1, 1]} : vector<32x128xbf16> to vector<16x8xbf16>
    %cst_20 = arith.constant dense<0.000000e+00> : vector<16x8xf32>
    %65 = tpu.matmul %63, %64, %cst_20 {dimension_numbers = #tpu.dot_dimension_numbers<[1], [0], [0], [1], [0, 0, 1, 1], [], []>} : vector<16x16xbf16>, vector<16x8xbf16>, vector<16x8xf32> -> vector<16x8xf32>
    %66 = vector.extract_strided_slice %2 {offsets = [24, 96], sizes = [8, 32], strides = [1, 1]} : vector<32x128xbf16> to vector<8x32xbf16>
    %67 = arith.truncf %65 : vector<16x8xf32> to vector<16x8xbf16>
    %cst_21 = arith.constant dense<0.000000e+00> : vector<16x32xf32>
    %68 = tpu.matmul %67, %66, %cst_21 {dimension_numbers = #tpu.dot_dimension_numbers<[1], [0], [0], [1], [0, 0, 1, 1], [], []>} : vector<16x8xbf16>, vector<8x32xbf16>, vector<16x32xf32> -> vector<16x32xf32>
    %69 = arith.addf %62, %68 : vector<16x32xf32>
    %cst_22 = arith.constant 0.000000e+00 : f32
    %70 = vector.broadcast %cst_22 : f32 to vector<16x32xf32>
    %71 = vector.extract_strided_slice %40 {offsets = [64, 0], sizes = [16, 16], strides = [1, 1]} : vector<128x16xbf16> to vector<16x16xbf16>
    %72 = vector.extract_strided_slice %4 {offsets = [16, 64], sizes = [16, 8], strides = [1, 1]} : vector<32x128xbf16> to vector<16x8xbf16>
    %cst_23 = arith.constant dense<0.000000e+00> : vector<16x8xf32>
    %73 = tpu.matmul %71, %72, %cst_23 {dimension_numbers = #tpu.dot_dimension_numbers<[1], [0], [0], [1], [0, 0, 1, 1], [], []>} : vector<16x16xbf16>, vector<16x8xbf16>, vector<16x8xf32> -> vector<16x8xf32>
    %74 = vector.extract_strided_slice %2 {offsets = [0, 96], sizes = [8, 32], strides = [1, 1]} : vector<32x128xbf16> to vector<8x32xbf16>
    %75 = arith.truncf %73 : vector<16x8xf32> to vector<16x8xbf16>
    %cst_24 = arith.constant dense<0.000000e+00> : vector<16x32xf32>
    %76 = tpu.matmul %75, %74, %cst_24 {dimension_numbers = #tpu.dot_dimension_numbers<[1], [0], [0], [1], [0, 0, 1, 1], [], []>} : vector<16x8xbf16>, vector<8x32xbf16>, vector<16x32xf32> -> vector<16x32xf32>
    %77 = arith.addf %70, %76 : vector<16x32xf32>
    %78 = vector.extract_strided_slice %40 {offsets = [80, 0], sizes = [16, 16], strides = [1, 1]} : vector<128x16xbf16> to vector<16x16xbf16>
    %79 = vector.extract_strided_slice %4 {offsets = [16, 72], sizes = [16, 8], strides = [1, 1]} : vector<32x128xbf16> to vector<16x8xbf16>
    %cst_25 = arith.constant dense<0.000000e+00> : vector<16x8xf32>
    %80 = tpu.matmul %78, %79, %cst_25 {dimension_numbers = #tpu.dot_dimension_numbers<[1], [0], [0], [1], [0, 0, 1, 1], [], []>} : vector<16x16xbf16>, vector<16x8xbf16>, vector<16x8xf32> -> vector<16x8xf32>
    %81 = vector.extract_strided_slice %2 {offsets = [8, 96], sizes = [8, 32], strides = [1, 1]} : vector<32x128xbf16> to vector<8x32xbf16>
    %82 = arith.truncf %80 : vector<16x8xf32> to vector<16x8xbf16>
    %cst_26 = arith.constant dense<0.000000e+00> : vector<16x32xf32>
    %83 = tpu.matmul %82, %81, %cst_26 {dimension_numbers = #tpu.dot_dimension_numbers<[1], [0], [0], [1], [0, 0, 1, 1], [], []>} : vector<16x8xbf16>, vector<8x32xbf16>, vector<16x32xf32> -> vector<16x32xf32>
    %84 = arith.addf %77, %83 : vector<16x32xf32>
    %85 = vector.extract_strided_slice %40 {offsets = [96, 0], sizes = [16, 16], strides = [1, 1]} : vector<128x16xbf16> to vector<16x16xbf16>
    %86 = vector.extract_strided_slice %4 {offsets = [16, 80], sizes = [16, 8], strides = [1, 1]} : vector<32x128xbf16> to vector<16x8xbf16>
    %cst_27 = arith.constant dense<0.000000e+00> : vector<16x8xf32>
    %87 = tpu.matmul %85, %86, %cst_27 {dimension_numbers = #tpu.dot_dimension_numbers<[1], [0], [0], [1], [0, 0, 1, 1], [], []>} : vector<16x16xbf16>, vector<16x8xbf16>, vector<16x8xf32> -> vector<16x8xf32>
    %88 = vector.extract_strided_slice %2 {offsets = [16, 96], sizes = [8, 32], strides = [1, 1]} : vector<32x128xbf16> to vector<8x32xbf16>
    %89 = arith.truncf %87 : vector<16x8xf32> to vector<16x8xbf16>
    %cst_28 = arith.constant dense<0.000000e+00> : vector<16x32xf32>
    %90 = tpu.matmul %89, %88, %cst_28 {dimension_numbers = #tpu.dot_dimension_numbers<[1], [0], [0], [1], [0, 0, 1, 1], [], []>} : vector<16x8xbf16>, vector<8x32xbf16>, vector<16x32xf32> -> vector<16x32xf32>
    %91 = arith.addf %84, %90 : vector<16x32xf32>
    %92 = vector.extract_strided_slice %40 {offsets = [112, 0], sizes = [16, 16], strides = [1, 1]} : vector<128x16xbf16> to vector<16x16xbf16>
    %93 = vector.extract_strided_slice %4 {offsets = [16, 88], sizes = [16, 8], strides = [1, 1]} : vector<32x128xbf16> to vector<16x8xbf16>
    %cst_29 = arith.constant dense<0.000000e+00> : vector<16x8xf32>
    %94 = tpu.matmul %92, %93, %cst_29 {dimension_numbers = #tpu.dot_dimension_numbers<[1], [0], [0], [1], [0, 0, 1, 1], [], []>} : vector<16x16xbf16>, vector<16x8xbf16>, vector<16x8xf32> -> vector<16x8xf32>
    %95 = vector.extract_strided_slice %2 {offsets = [24, 96], sizes = [8, 32], strides = [1, 1]} : vector<32x128xbf16> to vector<8x32xbf16>
    %96 = arith.truncf %94 : vector<16x8xf32> to vector<16x8xbf16>
    %cst_30 = arith.constant dense<0.000000e+00> : vector<16x32xf32>
    %97 = tpu.matmul %96, %95, %cst_30 {dimension_numbers = #tpu.dot_dimension_numbers<[1], [0], [0], [1], [0, 0, 1, 1], [], []>} : vector<16x8xbf16>, vector<8x32xbf16>, vector<16x32xf32> -> vector<16x32xf32>
    %98 = arith.addf %91, %97 : vector<16x32xf32>
    %99 = tpu.concatenate %69, %98 in 0 : vector<16x32xf32>, vector<16x32xf32> -> vector<32x32xf32>
    %c0_31 = arith.constant 0 : index
    %c0_32 = arith.constant 0 : index
    %100 = vector.load %arg3[%c0_31, %c0_32] : memref<48x32xf32, #tpu.memory_space<vmem>>, vector<48x32xf32>
    %101 = vector.extract_strided_slice %100 {offsets = [0, 0], sizes = [32, 8], strides = [1, 1]} : vector<48x32xf32> to vector<32x8xf32>
    %102 = vector.extract_strided_slice %100 {offsets = [32, 0], sizes = [8, 32], strides = [1, 1]} : vector<48x32xf32> to vector<8x32xf32>
    %103 = vector.extract_strided_slice %100 {offsets = [40, 0], sizes = [1, 32], strides = [1, 1]} : vector<48x32xf32> to vector<1x32xf32>
    %104 = vector.extract_strided_slice %100 {offsets = [41, 0], sizes = [1, 8], strides = [1, 1]} : vector<48x32xf32> to vector<1x8xf32>
    %105 = vector.extract_strided_slice %100 {offsets = [42, 0], sizes = [1, 32], strides = [1, 1]} : vector<48x32xf32> to vector<1x32xf32>
    %106 = vector.broadcast %103 : vector<1x32xf32> to vector<32x32xf32>
    %107 = arith.addf %99, %106 : vector<32x32xf32>
    %108 = arith.truncf %107 : vector<32x32xf32> to vector<32x32xbf16>
    %109 = arith.truncf %101 : vector<32x8xf32> to vector<32x8xbf16>
    %cst_33 = arith.constant dense<0.000000e+00> : vector<32x8xf32>
    %110 = tpu.matmul %108, %109, %cst_33 {dimension_numbers = #tpu.dot_dimension_numbers<[1], [0], [0], [1], [0, 0, 1, 1], [], []>} : vector<32x32xbf16>, vector<32x8xbf16>, vector<32x8xf32> -> vector<32x8xf32>
    %111 = vector.broadcast %104 : vector<1x8xf32> to vector<32x8xf32>
    %112 = arith.addf %110, %111 : vector<32x8xf32>
    %cst_34 = arith.constant 5.000000e-01 : f32
    %113 = vector.broadcast %cst_34 : f32 to vector<32x8xf32>
    %114 = arith.mulf %113, %112 : vector<32x8xf32>
    %cst_35 = arith.constant 0.707106769 : f32
    %115 = vector.broadcast %cst_35 : f32 to vector<32x8xf32>
    %116 = arith.mulf %112, %115 : vector<32x8xf32>
    %117 = math.erf %116 : vector<32x8xf32>
    %cst_36 = arith.constant 1.000000e+00 : f32
    %118 = vector.broadcast %cst_36 : f32 to vector<32x8xf32>
    %119 = arith.addf %118, %117 : vector<32x8xf32>
    %120 = arith.mulf %114, %119 : vector<32x8xf32>
    %121 = arith.truncf %120 : vector<32x8xf32> to vector<32x8xbf16>
    %122 = arith.truncf %102 : vector<8x32xf32> to vector<8x32xbf16>
    %cst_37 = arith.constant dense<0.000000e+00> : vector<32x32xf32>
    %123 = tpu.matmul %121, %122, %cst_37 {dimension_numbers = #tpu.dot_dimension_numbers<[1], [0], [0], [1], [0, 0, 1, 1], [], []>} : vector<32x8xbf16>, vector<8x32xbf16>, vector<32x32xf32> -> vector<32x32xf32>
    %124 = vector.broadcast %105 : vector<1x32xf32> to vector<32x32xf32>
    %125 = arith.addf %123, %124 : vector<32x32xf32>
    %126 = arith.addf %107, %125 : vector<32x32xf32>
    %c0_38 = arith.constant 0 : index
    %c0_39 = arith.constant 0 : index
    %127 = vector.load %arg4[%c0_38, %c0_39] : memref<32x32xf32, #tpu.memory_space<vmem>>, vector<32x32xf32>
    tpu.vector_store %arg4[%c0_38, %c0_39], %126 {strides = array<i32>} : memref<32x32xf32, #tpu.memory_space<vmem>>, vector<32x32xf32>,
    return
  }
  func.func @transform_0(%arg0: i32) -> (i32, i32) {
    %c0_i32 = arith.constant 0 : i32
    %c0_i32_0 = arith.constant 0 : i32
    return %arg0, %c0_i32 : i32, i32
  }
  func.func @transform_1(%arg0: i32) -> (i32, i32) {
    %c0_i32 = arith.constant 0 : i32
    %c0_i32_0 = arith.constant 0 : i32
    %c0_i32_1 = arith.constant 0 : i32
    return %c0_i32, %c0_i32_0 : i32, i32
  }
  func.func @transform_2(%arg0: i32) -> (i32, i32) {
    %c0_i32 = arith.constant 0 : i32
    %c0_i32_0 = arith.constant 0 : i32
    %c0_i32_1 = arith.constant 0 : i32
    return %c0_i32, %c0_i32_0 : i32, i32
  }
  func.func @transform_3(%arg0: i32) -> (i32, i32) {
    %c0_i32 = arith.constant 0 : i32
    %c0_i32_0 = arith.constant 0 : i32
    return %arg0, %c0_i32 : i32, i32
  }
}

</mosaic_0001>

<llo_original>
// kernel: tpu_custom_call.1
$region0: #{tpu_custom_call.1}
  #allocation0 [shape = 'u32[]', space=smem, size = 0x4, offset = 0x4, fixed_abs, tag = 'smem constant byte address 0x4 - core index']
  #allocation1 [shape = 'u32[144,128]{1,0:T(1,128)}', space=vmem, size = 0x12000, scoped, tag = 'internal scratch']
  %s0 = inlined_call_operand.vmem [shape: f32[32,32], index: 0, kind: input, shape index: {}]
  %s1 = inlined_call_operand.vmem [shape: bf16[32,128], index: 1, kind: input, shape index: {}]
  %s2 = inlined_call_operand.vmem [shape: f32[48,32], index: 2, kind: input, shape index: {}]
  %s3 = inlined_call_operand.hbm [shape: f32[32,32], index: 3, kind: output, shape index: {}]
  %s4 = sld [smem:[#allocation0]]
  $region22: #{tpu_custom_call.1} parent=0
    _
  %s6 = ssub.s32 1, %s4
  %s7 = scalar_select 0, %s6, %s4
  $region1: #{tpu_custom_call.1} parent=0
    #allocation2 [shape = 'u8[16384]{0}', space=vmem, size = 0x4000, scoped, tag = 'output window, operand 0, single buffered']
    #allocation3 [shape = 's32[1]{0}', space=sflag, size = 0x4, scoped, tag = 'scoped memory for tpu_custom_call.1']
    %8 = vsyncpa [#allocation3], 0
    // Predicated region
    $region2: #{tpu_custom_call.1} parent=1 // pred_check
      _
    $region3: #{tpu_custom_call.1} parent=1 // pred_check_branch
      %10 = sbr.rel (0) target = $region5
    $region4: #{tpu_custom_call.1} parent=1 // pred_region
      _
    $region5: #{tpu_custom_call.1} parent=1 // pred_fallthru
      _
    // Predicated region
    $region6: #{tpu_custom_call.1} parent=1 // pred_check
      _
    $region7: #{tpu_custom_call.1} parent=1 // pred_check_branch
      %12 = sbr.rel (0) target = $region9
    $region8: #{tpu_custom_call.1} parent=1 // pred_region
      _
    $region9: #{tpu_custom_call.1} parent=1 // pred_fallthru
      _
    // Predicated region
    $region10: #{tpu_custom_call.1} parent=1 // pred_check
      _
    $region11: #{tpu_custom_call.1} parent=1 // pred_check_branch
      %14 = sbr.rel (0) target = $region13
    $region12: #{tpu_custom_call.1} parent=1 // pred_region
      _
    $region13: #{tpu_custom_call.1} parent=1 // pred_fallthru
      _
    %v16 = vld [vmem:[%s0] sm:$0xff]
    %v17 = vld [vmem:[%s0 + $0x8] sm:$0xff]
    %v18 = vld [vmem:[%s0 + $0x10] sm:$0xff]
    %v19 = vld [vmem:[%s0 + $0x18] sm:$0xff]
    %v20 = vpack.c.bf16 %v17, %v16
    %v21 = vpack.c.bf16 %v19, %v18
    %v22 = vld [vmem:[%s1] sm:$0xf]
    %v23 = vld [vmem:[%s1 + $0x4] sm:$0xf]
    %v24 = vld [vmem:[%s1 + $0x8] sm:$0xf]
    %v25 = vld [vmem:[%s1 + $0xc] sm:$0xf]
    %v30 = vunpack.c.l.b16 %v22
    %v31 = vunpack.c.l.b16 %v23
    %v32 = vunpack.c.l.b16 %v24
    %v33 = vunpack.c.l.b16 %v25
    %v34 = vpack.c.b16 %v31, %v30
    %v35 = vpack.c.b16 %v33, %v32
    %vm38 = vcmask 261120
    %v40 = vsel %vm38, %v20, 0
    %v43 = vsel %vm38, %v21, 0
    %45 = vmatprep.subr.bf16.mxu0 0
    %46 = vmatpush1.bf16.msra.mxu0 %v34
    %47 = vmatprep.subr.bf16.mxu0 0
    %48 = vmatpush1.bf16.msra.mxu0 %v35
    %49 = vmatprep.subr.bf16.mxu0 0
    %50 = vmatpush1.bf16.msra.mxu0 0
    %51 = vmatprep.subr.bf16.mxu0 0
    %52 = vmatpush1.bf16.msra.mxu0 0
    %53 = vmatprep.subr.bf16.mxu0 0
    %54 = vmatpush1.bf16.msra.mxu0 0
    %55 = vmatprep.subr.bf16.mxu0 0
    %56 = vmatpush1.bf16.msra.mxu0 0
    %57 = vmatprep.subr.bf16.mxu0 0
    %58 = vmatpush1.bf16.msra.mxu0 0
    %59 = vmatprep.subr.bf16.mxu0 0
    %60 = vmatpush1.bf16.msra.mxu0 0
    %61 = vmatprep.subr.bf16.mxu0 0
    %62 = vmatpush1.bf16.msra.mxu0 0
    %63 = vmatprep.subr.bf16.mxu0 0
    %64 = vmatpush1.bf16.msra.mxu0 0
    %65 = vmatprep.subr.bf16.mxu0 0
    %66 = vmatpush1.bf16.msra.mxu0 0
    %67 = vmatprep.subr.bf16.mxu0 0
    %68 = vmatpush1.bf16.msra.mxu0 0
    %69 = vmatprep.subr.bf16.mxu0 0
    %70 = vmatpush1.bf16.msra.mxu0 0
    %71 = vmatprep.subr.bf16.mxu0 0
    %72 = vmatpush1.bf16.msra.mxu0 0
    %73 = vmatprep.subr.bf16.mxu0 0
    %74 = vmatpush1.bf16.msra.mxu0 0
    %75 = vmatprep.subr.bf16.mxu0 0
    %76 = vmatpush1.bf16.msra.mxu0 0
    %77 = vmatprep.mubr.bf16.mxu0 0
    %78 = vmatmul.mubr.bf16.gmra.mrb[0].mxu0 %v40
    %v79 = vpop.f32.mrb[0].mxu0
    %v80 = vadd.f32 0.0, %v79
    %v81 = vpop.f32.mrb[0].mxu0
    %v82 = vpop.f32.mrb[0].mxu0
    %v83 = vadd.f32 0.0, %v82
    %v84 = vpop.f32.mrb[0].mxu0
    %85 = vmatprep.mubr.bf16.mxu0 0
    %86 = vmatmul.mubr.bf16.gmra.mrb[0].mxu0 %v43
    %v87 = vpop.f32.mrb[0].mxu0
    %v88 = vadd.f32 0.0, %v87
    %v89 = vpop.f32.mrb[0].mxu0
    %v90 = vpop.f32.mrb[0].mxu0
    %v91 = vadd.f32 0.0, %v90
    %v92 = vpop.f32.mrb[0].mxu0
    %93 = vdwg.mxu0
    %v94 = vpack.c.bf16 %v83, %v80
    %v95 = vpack.c.bf16 %v91, %v88
    %97 = vrot.lane.b32.xlu0 %v94, 96
    %v98 = vpop.permute.xlu0 %97
    %vm99 = vcmask 64512
    %v101 = vsel %vm99, %v94, 0
    %v104 = vsel %vm99, %v98, 0
    %106 = vmatprep.subr.bf16.mxu0 0
    %107 = vmatpush1.bf16.xpose.msra.mxu0 %v104
    %108 = vmatprep.subr.bf16.mxu0 0
    %109 = vmatpush1.bf16.xpose.msra.mxu0 0
    %110 = vmatprep.subr.bf16.mxu0 0
    %111 = vmatpush1.bf16.xpose.msra.mxu0 0
    %112 = vmatprep.subr.bf16.mxu0 0
    %113 = vmatpush1.bf16.xpose.msra.mxu0 0
    %114 = vmatprep.subr.bf16.mxu0 0
    %115 = vmatpush1.bf16.xpose.msra.mxu0 0
    %116 = vmatprep.subr.bf16.mxu0 0
    %117 = vmatpush1.bf16.xpose.msra.mxu0 0
    %118 = vmatprep.subr.bf16.mxu0 0
    %119 = vmatpush1.bf16.xpose.msra.mxu0 0
    %120 = vmatprep.subr.bf16.mxu0 0
    %121 = vmatpush1.bf16.xpose.msra.mxu0 0
    %122 = vmatprep.subr.bf16.mxu0 0
    %123 = vmatpush1.bf16.xpose.msra.mxu0 0
    %124 = vmatprep.subr.bf16.mxu0 0
    %125 = vmatpush1.bf16.xpose.msra.mxu0 0
    %126 = vmatprep.subr.bf16.mxu0 0
    %127 = vmatpush1.bf16.xpose.msra.mxu0 0
    %128 = vmatprep.subr.bf16.mxu0 0
    %129 = vmatpush1.bf16.xpose.msra.mxu0 0
    %130 = vmatprep.subr.bf16.mxu0 0
    %131 = vmatpush1.bf16.xpose.msra.mxu0 0
    %132 = vmatprep.subr.bf16.mxu0 0
    %133 = vmatpush1.bf16.xpose.msra.mxu0 0
    %134 = vmatprep.subr.bf16.mxu0 0
    %135 = vmatpush1.bf16.xpose.msra.mxu0 0
    %136 = vmatprep.subr.bf16.mxu0 0
    %137 = vmatpush1.bf16.xpose.msra.mxu0 0
    %138 = vmatprep.mubr.bf16.mxu0 0
    %139 = vmatmul.mubr.bf16.gmra.mrb[0].mxu0 %v101
    %v140 = vpop.f32.mrb[0].mxu0
    %v141 = vadd.f32 0.0, %v140
    %v142 = vpop.f32.mrb[0].mxu0
    %v143 = vpop.f32.mrb[0].mxu0
    %v144 = vadd.f32 0.0, %v143
    %v145 = vpop.f32.mrb[0].mxu0
    %146 = vdwg.mxu0
    %147 = vrot.lane.b32.xlu0 %v94, 120
    %v148 = vpop.permute.xlu0 %147
    %149 = vrot.lane.b32.xlu0 %v94, 88
    %v150 = vpop.permute.xlu0 %149
    %v152 = vsel %vm99, %v148, 0
    %v155 = vsel %vm99, %v150, 0
    %157 = vmatprep.subr.bf16.mxu0 0
    %158 = vmatpush1.bf16.xpose.msra.mxu0 %v155
    %159 = vmatprep.subr.bf16.mxu0 0
    %160 = vmatpush1.bf16.xpose.msra.mxu0 0
    %161 = vmatprep.subr.bf16.mxu0 0
    %162 = vmatpush1.bf16.xpose.msra.mxu0 0
    %163 = vmatprep.subr.bf16.mxu0 0
    %164 = vmatpush1.bf16.xpose.msra.mxu0 0
    %165 = vmatprep.subr.bf16.mxu0 0
    %166 = vmatpush1.bf16.xpose.msra.mxu0 0
    %167 = vmatprep.subr.bf16.mxu0 0
    %168 = vmatpush1.bf16.xpose.msra.mxu0 0
    %169 = vmatprep.subr.bf16.mxu0 0
    %170 = vmatpush1.bf16.xpose.msra.mxu0 0
    %171 = vmatprep.subr.bf16.mxu0 0
    %172 = vmatpush1.bf16.xpose.msra.mxu0 0
    %173 = vmatprep.subr.bf16.mxu0 0
    %174 = vmatpush1.bf16.xpose.msra.mxu0 0
    %175 = vmatprep.subr.bf16.mxu0 0
    %176 = vmatpush1.bf16.xpose.msra.mxu0 0
    %177 = vmatprep.subr.bf16.mxu0 0
    %178 = vmatpush1.bf16.xpose.msra.mxu0 0
    %179 = vmatprep.subr.bf16.mxu0 0
    %180 = vmatpush1.bf16.xpose.msra.mxu0 0
    %181 = vmatprep.subr.bf16.mxu0 0
    %182 = vmatpush1.bf16.xpose.msra.mxu0 0
    %183 = vmatprep.subr.bf16.mxu0 0
    %184 = vmatpush1.bf16.xpose.msra.mxu0 0
    %185 = vmatprep.subr.bf16.mxu0 0
    %186 = vmatpush1.bf16.xpose.msra.mxu0 0
    %187 = vmatprep.subr.bf16.mxu0 0
    %188 = vmatpush1.bf16.xpose.msra.mxu0 0
    %189 = vmatprep.mubr.bf16.mxu0 0
    %190 = vmatmul.mubr.bf16.gmra.mrb[0].mxu0 %v152
    %v191 = vpop.f32.mrb[0].mxu0
    %v192 = vadd.f32 0.0, %v191
    %v193 = vpop.f32.mrb[0].mxu0
    %v194 = vpop.f32.mrb[0].mxu0
    %v195 = vadd.f32 0.0, %v194
    %v196 = vpop.f32.mrb[0].mxu0
    %197 = vdwg.mxu0
    %198 = vrot.lane.b32.xlu0 %v94, 112
    %v199 = vpop.permute.xlu0 %198
    %200 = vrot.lane.b32.xlu0 %v94, 80
    %v201 = vpop.permute.xlu0 %200
    %v203 = vsel %vm99, %v199, 0
    %v206 = vsel %vm99, %v201, 0
    %208 = vmatprep.subr.bf16.mxu0 0
    %209 = vmatpush1.bf16.xpose.msra.mxu0 %v206
    %210 = vmatprep.subr.bf16.mxu0 0
    %211 = vmatpush1.bf16.xpose.msra.mxu0 0
    %212 = vmatprep.subr.bf16.mxu0 0
    %213 = vmatpush1.bf16.xpose.msra.mxu0 0
    %214 = vmatprep.subr.bf16.mxu0 0
    %215 = vmatpush1.bf16.xpose.msra.mxu0 0
    %216 = vmatprep.subr.bf16.mxu0 0
    %217 = vmatpush1.bf16.xpose.msra.mxu0 0
    %218 = vmatprep.subr.bf16.mxu0 0
    %219 = vmatpush1.bf16.xpose.msra.mxu0 0
    %220 = vmatprep.subr.bf16.mxu0 0
    %221 = vmatpush1.bf16.xpose.msra.mxu0 0
    %222 = vmatprep.subr.bf16.mxu0 0
    %223 = vmatpush1.bf16.xpose.msra.mxu0 0
    %224 = vmatprep.subr.bf16.mxu0 0
    %225 = vmatpush1.bf16.xpose.msra.mxu0 0
    %226 = vmatprep.subr.bf16.mxu0 0
    %227 = vmatpush1.bf16.xpose.msra.mxu0 0
    %228 = vmatprep.subr.bf16.mxu0 0
    %229 = vmatpush1.bf16.xpose.msra.mxu0 0
    %230 = vmatprep.subr.bf16.mxu0 0
    %231 = vmatpush1.bf16.xpose.msra.mxu0 0
    %232 = vmatprep.subr.bf16.mxu0 0
    %233 = vmatpush1.bf16.xpose.msra.mxu0 0
    %234 = vmatprep.subr.bf16.mxu0 0
    %235 = vmatpush1.bf16.xpose.msra.mxu0 0
    %236 = vmatprep.subr.bf16.mxu0 0
    %237 = vmatpush1.bf16.xpose.msra.mxu0 0
    %238 = vmatprep.subr.bf16.mxu0 0
    %239 = vmatpush1.bf16.xpose.msra.mxu0 0
    %240 = vmatprep.mubr.bf16.mxu0 0
    %241 = vmatmul.mubr.bf16.gmra.mrb[0].mxu0 %v203
    %v242 = vpop.f32.mrb[0].mxu0
    %v243 = vadd.f32 0.0, %v242
    %v244 = vpop.f32.mrb[0].mxu0
    %v245 = vpop.f32.mrb[0].mxu0
    %v246 = vadd.f32 0.0, %v245
    %v247 = vpop.f32.mrb[0].mxu0
    %248 = vdwg.mxu0
    %249 = vrot.lane.b32.xlu0 %v94, 104
    %v250 = vpop.permute.xlu0 %249
    %251 = vrot.lane.b32.xlu0 %v94, 72
    %v252 = vpop.permute.xlu0 %251
    %v254 = vsel %vm99, %v250, 0
    %v257 = vsel %vm99, %v252, 0
    %259 = vmatprep.subr.bf16.mxu0 0
    %260 = vmatpush1.bf16.xpose.msra.mxu0 %v257
    %261 = vmatprep.subr.bf16.mxu0 0
    %262 = vmatpush1.bf16.xpose.msra.mxu0 0
    %263 = vmatprep.subr.bf16.mxu0 0
    %264 = vmatpush1.bf16.xpose.msra.mxu0 0
    %265 = vmatprep.subr.bf16.mxu0 0
    %266 = vmatpush1.bf16.xpose.msra.mxu0 0
    %267 = vmatprep.subr.bf16.mxu0 0
    %268 = vmatpush1.bf16.xpose.msra.mxu0 0
    %269 = vmatprep.subr.bf16.mxu0 0
    %270 = vmatpush1.bf16.xpose.msra.mxu0 0
    %271 = vmatprep.subr.bf16.mxu0 0
    %272 = vmatpush1.bf16.xpose.msra.mxu0 0
    %273 = vmatprep.subr.bf16.mxu0 0
    %274 = vmatpush1.bf16.xpose.msra.mxu0 0
    %275 = vmatprep.subr.bf16.mxu0 0
    %276 = vmatpush1.bf16.xpose.msra.mxu0 0
    %277 = vmatprep.subr.bf16.mxu0 0
    %278 = vmatpush1.bf16.xpose.msra.mxu0 0
    %279 = vmatprep.subr.bf16.mxu0 0
    %280 = vmatpush1.bf16.xpose.msra.mxu0 0
    %281 = vmatprep.subr.bf16.mxu0 0
    %282 = vmatpush1.bf16.xpose.msra.mxu0 0
    %283 = vmatprep.subr.bf16.mxu0 0
    %284 = vmatpush1.bf16.xpose.msra.mxu0 0
    %285 = vmatprep.subr.bf16.mxu0 0
    %286 = vmatpush1.bf16.xpose.msra.mxu0 0
    %287 = vmatprep.subr.bf16.mxu0 0
    %288 = vmatpush1.bf16.xpose.msra.mxu0 0
    %289 = vmatprep.subr.bf16.mxu0 0
    %290 = vmatpush1.bf16.xpose.msra.mxu0 0
    %291 = vmatprep.mubr.bf16.mxu0 0
    %292 = vmatmul.mubr.bf16.gmra.mrb[0].mxu0 %v254
    %v293 = vpop.f32.mrb[0].mxu0
    %v294 = vadd.f32 0.0, %v293
    %v295 = vpop.f32.mrb[0].mxu0
    %v296 = vpop.f32.mrb[0].mxu0
    %v297 = vadd.f32 0.0, %v296
    %v298 = vpop.f32.mrb[0].mxu0
    %299 = vdwg.mxu0
    %301 = vrot.lane.b32.xlu0 %v95, 96
    %v302 = vpop.permute.xlu0 %301
    %v304 = vsel %vm99, %v95, 0
    %v307 = vsel %vm99, %v302, 0
    %309 = vmatprep.subr.bf16.mxu0 0
    %310 = vmatpush1.bf16.xpose.msra.mxu0 %v307
    %311 = vmatprep.subr.bf16.mxu0 0
    %312 = vmatpush1.bf16.xpose.msra.mxu0 0
    %313 = vmatprep.subr.bf16.mxu0 0
    %314 = vmatpush1.bf16.xpose.msra.mxu0 0
    %315 = vmatprep.subr.bf16.mxu0 0
    %316 = vmatpush1.bf16.xpose.msra.mxu0 0
    %317 = vmatprep.subr.bf16.mxu0 0
    %318 = vmatpush1.bf16.xpose.msra.mxu0 0
    %319 = vmatprep.subr.bf16.mxu0 0
    %320 = vmatpush1.bf16.xpose.msra.mxu0 0
    %321 = vmatprep.subr.bf16.mxu0 0
    %322 = vmatpush1.bf16.xpose.msra.mxu0 0
    %323 = vmatprep.subr.bf16.mxu0 0
    %324 = vmatpush1.bf16.xpose.msra.mxu0 0
    %325 = vmatprep.subr.bf16.mxu0 0
    %326 = vmatpush1.bf16.xpose.msra.mxu0 0
    %327 = vmatprep.subr.bf16.mxu0 0
    %328 = vmatpush1.bf16.xpose.msra.mxu0 0
    %329 = vmatprep.subr.bf16.mxu0 0
    %330 = vmatpush1.bf16.xpose.msra.mxu0 0
    %331 = vmatprep.subr.bf16.mxu0 0
    %332 = vmatpush1.bf16.xpose.msra.mxu0 0
    %333 = vmatprep.subr.bf16.mxu0 0
    %334 = vmatpush1.bf16.xpose.msra.mxu0 0
    %335 = vmatprep.subr.bf16.mxu0 0
    %336 = vmatpush1.bf16.xpose.msra.mxu0 0
    %337 = vmatprep.subr.bf16.mxu0 0
    %338 = vmatpush1.bf16.xpose.msra.mxu0 0
    %339 = vmatprep.subr.bf16.mxu0 0
    %340 = vmatpush1.bf16.xpose.msra.mxu0 0
    %341 = vmatprep.mubr.bf16.mxu0 0
    %342 = vmatmul.mubr.bf16.gmra.mrb[0].mxu0 %v304
    %v343 = vpop.f32.mrb[0].mxu0
    %v344 = vadd.f32 0.0, %v343
    %v345 = vpop.f32.mrb[0].mxu0
    %v346 = vpop.f32.mrb[0].mxu0
    %v347 = vadd.f32 0.0, %v346
    %v348 = vpop.f32.mrb[0].mxu0
    %349 = vdwg.mxu0
    %350 = vrot.lane.b32.xlu0 %v95, 120
    %v351 = vpop.permute.xlu0 %350
    %352 = vrot.lane.b32.xlu0 %v95, 88
    %v353 = vpop.permute.xlu0 %352
    %v355 = vsel %vm99, %v351, 0
    %v358 = vsel %vm99, %v353, 0
    %360 = vmatprep.subr.bf16.mxu0 0
    %361 = vmatpush1.bf16.xpose.msra.mxu0 %v358
    %362 = vmatprep.subr.bf16.mxu0 0
    %363 = vmatpush1.bf16.xpose.msra.mxu0 0
    %364 = vmatprep.subr.bf16.mxu0 0
    %365 = vmatpush1.bf16.xpose.msra.mxu0 0
    %366 = vmatprep.subr.bf16.mxu0 0
    %367 = vmatpush1.bf16.xpose.msra.mxu0 0
    %368 = vmatprep.subr.bf16.mxu0 0
    %369 = vmatpush1.bf16.xpose.msra.mxu0 0
    %370 = vmatprep.subr.bf16.mxu0 0
    %371 = vmatpush1.bf16.xpose.msra.mxu0 0
    %372 = vmatprep.subr.bf16.mxu0 0
    %373 = vmatpush1.bf16.xpose.msra.mxu0 0
    %374 = vmatprep.subr.bf16.mxu0 0
    %375 = vmatpush1.bf16.xpose.msra.mxu0 0
    %376 = vmatprep.subr.bf16.mxu0 0
    %377 = vmatpush1.bf16.xpose.msra.mxu0 0
    %378 = vmatprep.subr.bf16.mxu0 0
    %379 = vmatpush1.bf16.xpose.msra.mxu0 0
    %380 = vmatprep.subr.bf16.mxu0 0
    %381 = vmatpush1.bf16.xpose.msra.mxu0 0
    %382 = vmatprep.subr.bf16.mxu0 0
    %383 = vmatpush1.bf16.xpose.msra.mxu0 0
    %384 = vmatprep.subr.bf16.mxu0 0
    %385 = vmatpush1.bf16.xpose.msra.mxu0 0
    %386 = vmatprep.subr.bf16.mxu0 0
    %387 = vmatpush1.bf16.xpose.msra.mxu0 0
    %388 = vmatprep.subr.bf16.mxu0 0
    %389 = vmatpush1.bf16.xpose.msra.mxu0 0
    %390 = vmatprep.subr.bf16.mxu0 0
    %391 = vmatpush1.bf16.xpose.msra.mxu0 0
    %392 = vmatprep.mubr.bf16.mxu0 0
    %393 = vmatmul.mubr.bf16.gmra.mrb[0].mxu0 %v355
    %v394 = vpop.f32.mrb[0].mxu0
    %v395 = vadd.f32 0.0, %v394
    %v396 = vpop.f32.mrb[0].mxu0
    %v397 = vpop.f32.mrb[0].mxu0
    %v398 = vadd.f32 0.0, %v397
    %v399 = vpop.f32.mrb[0].mxu0
    %400 = vdwg.mxu0
    %401 = vrot.lane.b32.xlu0 %v95, 112
    %v402 = vpop.permute.xlu0 %401
    %403 = vrot.lane.b32.xlu0 %v95, 80
    %v404 = vpop.permute.xlu0 %403
    %v406 = vsel %vm99, %v402, 0
    %v409 = vsel %vm99, %v404, 0
    %411 = vmatprep.subr.bf16.mxu0 0
    %412 = vmatpush1.bf16.xpose.msra.mxu0 %v409
    %413 = vmatprep.subr.bf16.mxu0 0
    %414 = vmatpush1.bf16.xpose.msra.mxu0 0
    %415 = vmatprep.subr.bf16.mxu0 0
    %416 = vmatpush1.bf16.xpose.msra.mxu0 0
    %417 = vmatprep.subr.bf16.mxu0 0
    %418 = vmatpush1.bf16.xpose.msra.mxu0 0
    %419 = vmatprep.subr.bf16.mxu0 0
    %420 = vmatpush1.bf16.xpose.msra.mxu0 0
    %421 = vmatprep.subr.bf16.mxu0 0
    %422 = vmatpush1.bf16.xpose.msra.mxu0 0
    %423 = vmatprep.subr.bf16.mxu0 0
    %424 = vmatpush1.bf16.xpose.msra.mxu0 0
    %425 = vmatprep.subr.bf16.mxu0 0
    %426 = vmatpush1.bf16.xpose.msra.mxu0 0
    %427 = vmatprep.subr.bf16.mxu0 0
    %428 = vmatpush1.bf16.xpose.msra.mxu0 0
    %429 = vmatprep.subr.bf16.mxu0 0
    %430 = vmatpush1.bf16.xpose.msra.mxu0 0
    %431 = vmatprep.subr.bf16.mxu0 0
    %432 = vmatpush1.bf16.xpose.msra.mxu0 0
    %433 = vmatprep.subr.bf16.mxu0 0
    %434 = vmatpush1.bf16.xpose.msra.mxu0 0
    %435 = vmatprep.subr.bf16.mxu0 0
    %436 = vmatpush1.bf16.xpose.msra.mxu0 0
    %437 = vmatprep.subr.bf16.mxu0 0
    %438 = vmatpush1.bf16.xpose.msra.mxu0 0
    %439 = vmatprep.subr.bf16.mxu0 0
    %440 = vmatpush1.bf16.xpose.msra.mxu0 0
    %441 = vmatprep.subr.bf16.mxu0 0
    %442 = vmatpush1.bf16.xpose.msra.mxu0 0
    %443 = vmatprep.mubr.bf16.mxu0 0
    %444 = vmatmul.mubr.bf16.gmra.mrb[0].mxu0 %v406
    %v445 = vpop.f32.mrb[0].mxu0
    %v446 = vadd.f32 0.0, %v445
    %v447 = vpop.f32.mrb[0].mxu0
    %v448 = vpop.f32.mrb[0].mxu0
    %v449 = vadd.f32 0.0, %v448
    %v450 = vpop.f32.mrb[0].mxu0
    %451 = vdwg.mxu0
    %452 = vrot.lane.b32.xlu0 %v95, 104
    %v453 = vpop.permute.xlu0 %452
    %454 = vrot.lane.b32.xlu0 %v95, 72
    %v455 = vpop.permute.xlu0 %454
    %v457 = vsel %vm99, %v453, 0
    %v460 = vsel %vm99, %v455, 0
    %462 = vmatprep.subr.bf16.mxu0 0
    %463 = vmatpush1.bf16.xpose.msra.mxu0 %v460
    %464 = vmatprep.subr.bf16.mxu0 0
    %465 = vmatpush1.bf16.xpose.msra.mxu0 0
    %466 = vmatprep.subr.bf16.mxu0 0
    %467 = vmatpush1.bf16.xpose.msra.mxu0 0
    %468 = vmatprep.subr.bf16.mxu0 0
    %469 = vmatpush1.bf16.xpose.msra.mxu0 0
    %470 = vmatprep.subr.bf16.mxu0 0
    %471 = vmatpush1.bf16.xpose.msra.mxu0 0
    %472 = vmatprep.subr.bf16.mxu0 0
    %473 = vmatpush1.bf16.xpose.msra.mxu0 0
    %474 = vmatprep.subr.bf16.mxu0 0
    %475 = vmatpush1.bf16.xpose.msra.mxu0 0
    %476 = vmatprep.subr.bf16.mxu0 0
    %477 = vmatpush1.bf16.xpose.msra.mxu0 0
    %478 = vmatprep.subr.bf16.mxu0 0
    %479 = vmatpush1.bf16.xpose.msra.mxu0 0
    %480 = vmatprep.subr.bf16.mxu0 0
    %481 = vmatpush1.bf16.xpose.msra.mxu0 0
    %482 = vmatprep.subr.bf16.mxu0 0
    %483 = vmatpush1.bf16.xpose.msra.mxu0 0
    %484 = vmatprep.subr.bf16.mxu0 0
    %485 = vmatpush1.bf16.xpose.msra.mxu0 0
    %486 = vmatprep.subr.bf16.mxu0 0
    %487 = vmatpush1.bf16.xpose.msra.mxu0 0
    %488 = vmatprep.subr.bf16.mxu0 0
    %489 = vmatpush1.bf16.xpose.msra.mxu0 0
    %490 = vmatprep.subr.bf16.mxu0 0
    %491 = vmatpush1.bf16.xpose.msra.mxu0 0
    %492 = vmatprep.subr.bf16.mxu0 0
    %493 = vmatpush1.bf16.xpose.msra.mxu0 0
    %494 = vmatprep.mubr.bf16.mxu0 0
    %495 = vmatmul.mubr.bf16.gmra.mrb[0].mxu0 %v457
    %v496 = vpop.f32.mrb[0].mxu0
    %v497 = vadd.f32 0.0, %v496
    %v498 = vpop.f32.mrb[0].mxu0
    %v499 = vpop.f32.mrb[0].mxu0
    %v500 = vadd.f32 0.0, %v499
    %v501 = vpop.f32.mrb[0].mxu0
    %502 = vdwg.mxu0
    %vm503 = vcmask 130048
    %v504 = vsel %vm503, %v141, -inf
    %505 = vmax.xlane.f32.xlu0 %v504
    %v506 = vpop.xlane.xlu0 %505
    %v507 = vsel %vm503, %v144, -inf
    %508 = vmax.xlane.f32.xlu0 %v507
    %v509 = vpop.xlane.xlu0 %508
    %v510 = vsel %vm503, %v192, -inf
    %511 = vmax.xlane.f32.xlu0 %v510
    %v512 = vpop.xlane.xlu0 %511
    %v513 = vsel %vm503, %v195, -inf
    %514 = vmax.xlane.f32.xlu0 %v513
    %v515 = vpop.xlane.xlu0 %514
    %v516 = vsel %vm503, %v243, -inf
    %517 = vmax.xlane.f32.xlu0 %v516
    %v518 = vpop.xlane.xlu0 %517
    %v519 = vsel %vm503, %v246, -inf
    %520 = vmax.xlane.f32.xlu0 %v519
    %v521 = vpop.xlane.xlu0 %520
    %v522 = vsel %vm503, %v294, -inf
    %523 = vmax.xlane.f32.xlu0 %v522
    %v524 = vpop.xlane.xlu0 %523
    %v525 = vsel %vm503, %v297, -inf
    %526 = vmax.xlane.f32.xlu0 %v525
    %v527 = vpop.xlane.xlu0 %526
    %v528 = vsel %vm503, %v344, -inf
    %529 = vmax.xlane.f32.xlu0 %v528
    %v530 = vpop.xlane.xlu0 %529
    %v531 = vsel %vm503, %v347, -inf
    %532 = vmax.xlane.f32.xlu0 %v531
    %v533 = vpop.xlane.xlu0 %532
    %v534 = vsel %vm503, %v395, -inf
    %535 = vmax.xlane.f32.xlu0 %v534
    %v536 = vpop.xlane.xlu0 %535
    %v537 = vsel %vm503, %v398, -inf
    %538 = vmax.xlane.f32.xlu0 %v537
    %v539 = vpop.xlane.xlu0 %538
    %v540 = vsel %vm503, %v446, -inf
    %541 = vmax.xlane.f32.xlu0 %v540
    %v542 = vpop.xlane.xlu0 %541
    %v543 = vsel %vm503, %v449, -inf
    %544 = vmax.xlane.f32.xlu0 %v543
    %v545 = vpop.xlane.xlu0 %544
    %v546 = vsel %vm503, %v497, -inf
    %547 = vmax.xlane.f32.xlu0 %v546
    %v548 = vpop.xlane.xlu0 %547
    %v549 = vsel %vm503, %v500, -inf
    %550 = vmax.xlane.f32.xlu0 %v549
    %v551 = vpop.xlane.xlu0 %550
    %v552 = vsub.f32 %v141, %v506
    %v553 = vsub.f32 %v144, %v509
    %v554 = vsub.f32 %v192, %v512
    %v555 = vsub.f32 %v195, %v515
    %v556 = vsub.f32 %v243, %v518
    %v557 = vsub.f32 %v246, %v521
    %v558 = vsub.f32 %v294, %v524
    %v559 = vsub.f32 %v297, %v527
    %v560 = vsub.f32 %v344, %v530
    %v561 = vsub.f32 %v347, %v533
    %v562 = vsub.f32 %v395, %v536
    %v563 = vsub.f32 %v398, %v539
    %v564 = vsub.f32 %v446, %v542
    %v565 = vsub.f32 %v449, %v545
    %v566 = vsub.f32 %v497, %v548
    %v567 = vsub.f32 %v500, %v551
    %v568 = vmul.f32 %v552, 1.442695
    %v569 = vpow.pop %v568
    %v570 = vmul.f32 %v553, 1.442695
    %v571 = vpow.pop %v570
    %v572 = vmul.f32 %v554, 1.442695
    %v573 = vpow.pop %v572
    %v574 = vmul.f32 %v555, 1.442695
    %v575 = vpow.pop %v574
    %v576 = vmul.f32 %v556, 1.442695
    %v577 = vpow.pop %v576
    %v578 = vmul.f32 %v557, 1.442695
    %v579 = vpow.pop %v578
    %v580 = vmul.f32 %v558, 1.442695
    %v581 = vpow.pop %v580
    %v582 = vmul.f32 %v559, 1.442695
    %v583 = vpow.pop %v582
    %v584 = vmul.f32 %v560, 1.442695
    %v585 = vpow.pop %v584
    %v586 = vmul.f32 %v561, 1.442695
    %v587 = vpow.pop %v586
    %v588 = vmul.f32 %v562, 1.442695
    %v589 = vpow.pop %v588
    %v590 = vmul.f32 %v563, 1.442695
    %v591 = vpow.pop %v590
    %v592 = vmul.f32 %v564, 1.442695
    %v593 = vpow.pop %v592
    %v594 = vmul.f32 %v565, 1.442695
    %v595 = vpow.pop %v594
    %v596 = vmul.f32 %v566, 1.442695
    %v597 = vpow.pop %v596
    %v598 = vmul.f32 %v567, 1.442695
    %v599 = vpow.pop %v598
    %v600 = vsel %vm503, %v569, 0.0
    %601 = vadd.xlane.f32.xlu0 %v600
    %v602 = vpop.xlane.xlu0 %601
    %v603 = vsel %vm503, %v571, 0.0
    %604 = vadd.xlane.f32.xlu0 %v603
    %v605 = vpop.xlane.xlu0 %604
    %v606 = vsel %vm503, %v573, 0.0
    %607 = vadd.xlane.f32.xlu0 %v606
    %v608 = vpop.xlane.xlu0 %607
    %v609 = vsel %vm503, %v575, 0.0
    %610 = vadd.xlane.f32.xlu0 %v609
    %v611 = vpop.xlane.xlu0 %610
    %v612 = vsel %vm503, %v577, 0.0
    %613 = vadd.xlane.f32.xlu0 %v612
    %v614 = vpop.xlane.xlu0 %613
    %v615 = vsel %vm503, %v579, 0.0
    %616 = vadd.xlane.f32.xlu0 %v615
    %v617 = vpop.xlane.xlu0 %616
    %v618 = vsel %vm503, %v581, 0.0
    %619 = vadd.xlane.f32.xlu0 %v618
    %v620 = vpop.xlane.xlu0 %619
    %v621 = vsel %vm503, %v583, 0.0
    %622 = vadd.xlane.f32.xlu0 %v621
    %v623 = vpop.xlane.xlu0 %622
    %v624 = vsel %vm503, %v585, 0.0
    %625 = vadd.xlane.f32.xlu0 %v624
    %v626 = vpop.xlane.xlu0 %625
    %v627 = vsel %vm503, %v587, 0.0
    %628 = vadd.xlane.f32.xlu0 %v627
    %v629 = vpop.xlane.xlu0 %628
    %v630 = vsel %vm503, %v589, 0.0
    %631 = vadd.xlane.f32.xlu0 %v630
    %v632 = vpop.xlane.xlu0 %631
    %v633 = vsel %vm503, %v591, 0.0
    %634 = vadd.xlane.f32.xlu0 %v633
    %v635 = vpop.xlane.xlu0 %634
    %v636 = vsel %vm503, %v593, 0.0
    %637 = vadd.xlane.f32.xlu0 %v636
    %v638 = vpop.xlane.xlu0 %637
    %v639 = vsel %vm503, %v595, 0.0
    %640 = vadd.xlane.f32.xlu0 %v639
    %v641 = vpop.xlane.xlu0 %640
    %v642 = vsel %vm503, %v597, 0.0
    %643 = vadd.xlane.f32.xlu0 %v642
    %v644 = vpop.xlane.xlu0 %643
    %v645 = vsel %vm503, %v599, 0.0
    %646 = vadd.xlane.f32.xlu0 %v645
    %v647 = vpop.xlane.xlu0 %646
    %v648 = vrcp.pop %v602
    %v649 = vrcp.pop %v605
    %v650 = vrcp.pop %v608
    %v651 = vrcp.pop %v611
    %v652 = vrcp.pop %v614
    %v653 = vrcp.pop %v617
    %v654 = vrcp.pop %v620
    %v655 = vrcp.pop %v623
    %v656 = vrcp.pop %v626
    %v657 = vrcp.pop %v629
    %v658 = vrcp.pop %v632
    %v659 = vrcp.pop %v635
    %v660 = vrcp.pop %v638
    %v661 = vrcp.pop %v641
    %v662 = vrcp.pop %v644
    %v663 = vrcp.pop %v647
    %v664 = vmul.f32 %v569, %v648
    %v665 = vmul.f32 %v571, %v649
    %v666 = vmul.f32 %v573, %v650
    %v667 = vmul.f32 %v575, %v651
    %v668 = vmul.f32 %v577, %v652
    %v669 = vmul.f32 %v579, %v653
    %v670 = vmul.f32 %v581, %v654
    %v671 = vmul.f32 %v583, %v655
    %v672 = vmul.f32 %v585, %v656
    %v673 = vmul.f32 %v587, %v657
    %v674 = vmul.f32 %v589, %v658
    %v675 = vmul.f32 %v591, %v659
    %v676 = vmul.f32 %v593, %v660
    %v677 = vmul.f32 %v595, %v661
    %v678 = vmul.f32 %v597, %v662
    %v679 = vmul.f32 %v599, %v663
    %v680 = vpack.c.bf16 %v665, %v664
    %v681 = vpack.c.bf16 %v667, %v666
    %v682 = vpack.c.bf16 %v669, %v668
    %v683 = vpack.c.bf16 %v671, %v670
    %v684 = vpack.c.bf16 %v673, %v672
    %v685 = vpack.c.bf16 %v675, %v674
    %v686 = vpack.c.bf16 %v677, %v676
    %v687 = vpack.c.bf16 %v679, %v678
    %688 = vrot.lane.b32.xlu0 %v94, 64
    %v689 = vpop.permute.xlu0 %688
    %v692 = vsel %vm503, %v680, 0
    %694 = vmatprep.subr.bf16.mxu0 0
    %695 = vmatpush1.bf16.msra.mxu0 %v689
    %696 = vmatprep.subr.bf16.mxu0 0
    %697 = vmatpush1.bf16.msra.mxu0 0
    %698 = vmatprep.subr.bf16.mxu0 0
    %699 = vmatpush1.bf16.msra.mxu0 0
    %700 = vmatprep.subr.bf16.mxu0 0
    %701 = vmatpush1.bf16.msra.mxu0 0
    %702 = vmatprep.subr.bf16.mxu0 0
    %703 = vmatpush1.bf16.msra.mxu0 0
    %704 = vmatprep.subr.bf16.mxu0 0
    %705 = vmatpush1.bf16.msra.mxu0 0
    %706 = vmatprep.subr.bf16.mxu0 0
    %707 = vmatpush1.bf16.msra.mxu0 0
    %708 = vmatprep.subr.bf16.mxu0 0
    %709 = vmatpush1.bf16.msra.mxu0 0
    %710 = vmatprep.subr.bf16.mxu0 0
    %711 = vmatpush1.bf16.msra.mxu0 0
    %712 = vmatprep.subr.bf16.mxu0 0
    %713 = vmatpush1.bf16.msra.mxu0 0
    %714 = vmatprep.subr.bf16.mxu0 0
    %715 = vmatpush1.bf16.msra.mxu0 0
    %716 = vmatprep.subr.bf16.mxu0 0
    %717 = vmatpush1.bf16.msra.mxu0 0
    %718 = vmatprep.subr.bf16.mxu0 0
    %719 = vmatpush1.bf16.msra.mxu0 0
    %720 = vmatprep.subr.bf16.mxu0 0
    %721 = vmatpush1.bf16.msra.mxu0 0
    %722 = vmatprep.subr.bf16.mxu0 0
    %723 = vmatpush1.bf16.msra.mxu0 0
    %724 = vmatprep.subr.bf16.mxu0 0
    %725 = vmatpush1.bf16.msra.mxu0 0
    %726 = vmatprep.mubr.bf16.mxu0 0
    %727 = vmatmul.mubr.bf16.gmra.mrb[0].mxu0 %v692
    %v728 = vpop.f32.mrb[0].mxu0
    %v729 = vadd.f32 0.0, %v728
    %v730 = vpop.f32.mrb[0].mxu0
    %v731 = vpop.f32.mrb[0].mxu0
    %v732 = vadd.f32 0.0, %v731
    %v733 = vpop.f32.mrb[0].mxu0
    %734 = vdwg.mxu0
    %v735 = vpack.c.bf16 %v732, %v729
    %736 = vrot.lane.b32.xlu0 %v94, 56
    %v737 = vpop.permute.xlu0 %736
    %v740 = vsel %vm503, %v681, 0
    %742 = vmatprep.subr.bf16.mxu0 0
    %743 = vmatpush1.bf16.msra.mxu0 %v737
    %744 = vmatprep.subr.bf16.mxu0 0
    %745 = vmatpush1.bf16.msra.mxu0 0
    %746 = vmatprep.subr.bf16.mxu0 0
    %747 = vmatpush1.bf16.msra.mxu0 0
    %748 = vmatprep.subr.bf16.mxu0 0
    %749 = vmatpush1.bf16.msra.mxu0 0
    %750 = vmatprep.subr.bf16.mxu0 0
    %751 = vmatpush1.bf16.msra.mxu0 0
    %752 = vmatprep.subr.bf16.mxu0 0
    %753 = vmatpush1.bf16.msra.mxu0 0
    %754 = vmatprep.subr.bf16.mxu0 0
    %755 = vmatpush1.bf16.msra.mxu0 0
    %756 = vmatprep.subr.bf16.mxu0 0
    %757 = vmatpush1.bf16.msra.mxu0 0
    %758 = vmatprep.subr.bf16.mxu0 0
    %759 = vmatpush1.bf16.msra.mxu0 0
    %760 = vmatprep.subr.bf16.mxu0 0
    %761 = vmatpush1.bf16.msra.mxu0 0
    %762 = vmatprep.subr.bf16.mxu0 0
    %763 = vmatpush1.bf16.msra.mxu0 0
    %764 = vmatprep.subr.bf16.mxu0 0
    %765 = vmatpush1.bf16.msra.mxu0 0
    %766 = vmatprep.subr.bf16.mxu0 0
    %767 = vmatpush1.bf16.msra.mxu0 0
    %768 = vmatprep.subr.bf16.mxu0 0
    %769 = vmatpush1.bf16.msra.mxu0 0
    %770 = vmatprep.subr.bf16.mxu0 0
    %771 = vmatpush1.bf16.msra.mxu0 0
    %772 = vmatprep.subr.bf16.mxu0 0
    %773 = vmatpush1.bf16.msra.mxu0 0
    %774 = vmatprep.mubr.bf16.mxu0 0
    %775 = vmatmul.mubr.bf16.gmra.mrb[0].mxu0 %v740
    %v776 = vpop.f32.mrb[0].mxu0
    %v777 = vadd.f32 0.0, %v776
    %v778 = vpop.f32.mrb[0].mxu0
    %v779 = vpop.f32.mrb[0].mxu0
    %v780 = vadd.f32 0.0, %v779
    %v781 = vpop.f32.mrb[0].mxu0
    %782 = vdwg.mxu0
    %v783 = vpack.c.bf16 %v780, %v777
    %v784 = vpack.c.b16 %v31, %v31
    %785 = vrot.lane.b32.xlu0 %v784, 32
    %v786 = vpop.permute.xlu0 %785
    %v788 = vsel %vm99, %v783, 0
    %vm790 = vcmask 1043456
    %v792 = vsel %vm790, %v786, 0
    %794 = vmatprep.subr.bf16.mxu0 0
    %795 = vmatpush1.bf16.msra.mxu0 %v792
    %796 = vmatprep.subr.bf16.mxu0 0
    %797 = vmatpush1.bf16.msra.mxu0 0
    %798 = vmatprep.subr.bf16.mxu0 0
    %799 = vmatpush1.bf16.msra.mxu0 0
    %800 = vmatprep.subr.bf16.mxu0 0
    %801 = vmatpush1.bf16.msra.mxu0 0
    %802 = vmatprep.subr.bf16.mxu0 0
    %803 = vmatpush1.bf16.msra.mxu0 0
    %804 = vmatprep.subr.bf16.mxu0 0
    %805 = vmatpush1.bf16.msra.mxu0 0
    %806 = vmatprep.subr.bf16.mxu0 0
    %807 = vmatpush1.bf16.msra.mxu0 0
    %808 = vmatprep.subr.bf16.mxu0 0
    %809 = vmatpush1.bf16.msra.mxu0 0
    %810 = vmatprep.subr.bf16.mxu0 0
    %811 = vmatpush1.bf16.msra.mxu0 0
    %812 = vmatprep.subr.bf16.mxu0 0
    %813 = vmatpush1.bf16.msra.mxu0 0
    %814 = vmatprep.subr.bf16.mxu0 0
    %815 = vmatpush1.bf16.msra.mxu0 0
    %816 = vmatprep.subr.bf16.mxu0 0
    %817 = vmatpush1.bf16.msra.mxu0 0
    %818 = vmatprep.subr.bf16.mxu0 0
    %819 = vmatpush1.bf16.msra.mxu0 0
    %820 = vmatprep.subr.bf16.mxu0 0
    %821 = vmatpush1.bf16.msra.mxu0 0
    %822 = vmatprep.subr.bf16.mxu0 0
    %823 = vmatpush1.bf16.msra.mxu0 0
    %824 = vmatprep.subr.bf16.mxu0 0
    %825 = vmatpush1.bf16.msra.mxu0 0
    %826 = vmatprep.mubr.bf16.mxu0 0
    %827 = vmatmul.mubr.bf16.gmra.mrb[0].mxu0 %v788
    %v828 = vpop.f32.mrb[0].mxu0
    %v829 = vadd.f32 0.0, %v828
    %v830 = vpop.f32.mrb[0].mxu0
    %v831 = vpop.f32.mrb[0].mxu0
    %v832 = vadd.f32 0.0, %v831
    %v833 = vpop.f32.mrb[0].mxu0
    %834 = vdwg.mxu0
    %v835 = vpack.c.b16 %v30, %v30
    %836 = vrot.lane.b32.xlu0 %v835, 32
    %v837 = vpop.permute.xlu0 %836
    %v839 = vsel %vm99, %v735, 0
    %v842 = vsel %vm790, %v837, 0
    %844 = vmatprep.subr.bf16.mxu0 0
    %845 = vmatpush1.bf16.msra.mxu0 %v842
    %846 = vmatprep.subr.bf16.mxu0 0
    %847 = vmatpush1.bf16.msra.mxu0 0
    %848 = vmatprep.subr.bf16.mxu0 0
    %849 = vmatpush1.bf16.msra.mxu0 0
    %850 = vmatprep.subr.bf16.mxu0 0
    %851 = vmatpush1.bf16.msra.mxu0 0
    %852 = vmatprep.subr.bf16.mxu0 0
    %853 = vmatpush1.bf16.msra.mxu0 0
    %854 = vmatprep.subr.bf16.mxu0 0
    %855 = vmatpush1.bf16.msra.mxu0 0
    %856 = vmatprep.subr.bf16.mxu0 0
    %857 = vmatpush1.bf16.msra.mxu0 0
    %858 = vmatprep.subr.bf16.mxu0 0
    %859 = vmatpush1.bf16.msra.mxu0 0
    %860 = vmatprep.subr.bf16.mxu0 0
    %861 = vmatpush1.bf16.msra.mxu0 0
    %862 = vmatprep.subr.bf16.mxu0 0
    %863 = vmatpush1.bf16.msra.mxu0 0
    %864 = vmatprep.subr.bf16.mxu0 0
    %865 = vmatpush1.bf16.msra.mxu0 0
    %866 = vmatprep.subr.bf16.mxu0 0
    %867 = vmatpush1.bf16.msra.mxu0 0
    %868 = vmatprep.subr.bf16.mxu0 0
    %869 = vmatpush1.bf16.msra.mxu0 0
    %870 = vmatprep.subr.bf16.mxu0 0
    %871 = vmatpush1.bf16.msra.mxu0 0
    %872 = vmatprep.subr.bf16.mxu0 0
    %873 = vmatpush1.bf16.msra.mxu0 0
    %874 = vmatprep.subr.bf16.mxu0 0
    %875 = vmatpush1.bf16.msra.mxu0 0
    %876 = vmatprep.mubr.bf16.mxu0 0
    %877 = vmatmul.mubr.bf16.gmra.mrb[0].mxu0 %v839
    %v878 = vpop.f32.mrb[0].mxu0
    %v879 = vadd.f32 %v829, %v878
    %v880 = vpop.f32.mrb[0].mxu0
    %v881 = vpop.f32.mrb[0].mxu0
    %v882 = vadd.f32 %v832, %v881
    %v883 = vpop.f32.mrb[0].mxu0
    %884 = vdwg.mxu0
    %885 = vrot.lane.b32.xlu0 %v94, 48
    %v886 = vpop.permute.xlu0 %885
    %v889 = vsel %vm503, %v682, 0
    %891 = vmatprep.subr.bf16.mxu0 0
    %892 = vmatpush1.bf16.msra.mxu0 %v886
    %893 = vmatprep.subr.bf16.mxu0 0
    %894 = vmatpush1.bf16.msra.mxu0 0
    %895 = vmatprep.subr.bf16.mxu0 0
    %896 = vmatpush1.bf16.msra.mxu0 0
    %897 = vmatprep.subr.bf16.mxu0 0
    %898 = vmatpush1.bf16.msra.mxu0 0
    %899 = vmatprep.subr.bf16.mxu0 0
    %900 = vmatpush1.bf16.msra.mxu0 0
    %901 = vmatprep.subr.bf16.mxu0 0
    %902 = vmatpush1.bf16.msra.mxu0 0
    %903 = vmatprep.subr.bf16.mxu0 0
    %904 = vmatpush1.bf16.msra.mxu0 0
    %905 = vmatprep.subr.bf16.mxu0 0
    %906 = vmatpush1.bf16.msra.mxu0 0
    %907 = vmatprep.subr.bf16.mxu0 0
    %908 = vmatpush1.bf16.msra.mxu0 0
    %909 = vmatprep.subr.bf16.mxu0 0
    %910 = vmatpush1.bf16.msra.mxu0 0
    %911 = vmatprep.subr.bf16.mxu0 0
    %912 = vmatpush1.bf16.msra.mxu0 0
    %913 = vmatprep.subr.bf16.mxu0 0
    %914 = vmatpush1.bf16.msra.mxu0 0
    %915 = vmatprep.subr.bf16.mxu0 0
    %916 = vmatpush1.bf16.msra.mxu0 0
    %917 = vmatprep.subr.bf16.mxu0 0
    %918 = vmatpush1.bf16.msra.mxu0 0
    %919 = vmatprep.subr.bf16.mxu0 0
    %920 = vmatpush1.bf16.msra.mxu0 0
    %921 = vmatprep.subr.bf16.mxu0 0
    %922 = vmatpush1.bf16.msra.mxu0 0
    %923 = vmatprep.mubr.bf16.mxu0 0
    %924 = vmatmul.mubr.bf16.gmra.mrb[0].mxu0 %v889
    %v925 = vpop.f32.mrb[0].mxu0
    %v926 = vadd.f32 0.0, %v925
    %v927 = vpop.f32.mrb[0].mxu0
    %v928 = vpop.f32.mrb[0].mxu0
    %v929 = vadd.f32 0.0, %v928
    %v930 = vpop.f32.mrb[0].mxu0
    %931 = vdwg.mxu0
    %v932 = vpack.c.bf16 %v929, %v926
    %v933 = vpack.c.b16 %v32, %v32
    %934 = vrot.lane.b32.xlu0 %v933, 32
    %v935 = vpop.permute.xlu0 %934
    %v937 = vsel %vm99, %v932, 0
    %v940 = vsel %vm790, %v935, 0
    %942 = vmatprep.subr.bf16.mxu0 0
    %943 = vmatpush1.bf16.msra.mxu0 %v940
    %944 = vmatprep.subr.bf16.mxu0 0
    %945 = vmatpush1.bf16.msra.mxu0 0
    %946 = vmatprep.subr.bf16.mxu0 0
    %947 = vmatpush1.bf16.msra.mxu0 0
    %948 = vmatprep.subr.bf16.mxu0 0
    %949 = vmatpush1.bf16.msra.mxu0 0
    %950 = vmatprep.subr.bf16.mxu0 0
    %951 = vmatpush1.bf16.msra.mxu0 0
    %952 = vmatprep.subr.bf16.mxu0 0
    %953 = vmatpush1.bf16.msra.mxu0 0
    %954 = vmatprep.subr.bf16.mxu0 0
    %955 = vmatpush1.bf16.msra.mxu0 0
    %956 = vmatprep.subr.bf16.mxu0 0
    %957 = vmatpush1.bf16.msra.mxu0 0
    %958 = vmatprep.subr.bf16.mxu0 0
    %959 = vmatpush1.bf16.msra.mxu0 0
    %960 = vmatprep.subr.bf16.mxu0 0
    %961 = vmatpush1.bf16.msra.mxu0 0
    %962 = vmatprep.subr.bf16.mxu0 0
    %963 = vmatpush1.bf16.msra.mxu0 0
    %964 = vmatprep.subr.bf16.mxu0 0
    %965 = vmatpush1.bf16.msra.mxu0 0
    %966 = vmatprep.subr.bf16.mxu0 0
    %967 = vmatpush1.bf16.msra.mxu0 0
    %968 = vmatprep.subr.bf16.mxu0 0
    %969 = vmatpush1.bf16.msra.mxu0 0
    %970 = vmatprep.subr.bf16.mxu0 0
    %971 = vmatpush1.bf16.msra.mxu0 0
    %972 = vmatprep.subr.bf16.mxu0 0
    %973 = vmatpush1.bf16.msra.mxu0 0
    %974 = vmatprep.mubr.bf16.mxu0 0
    %975 = vmatmul.mubr.bf16.gmra.mrb[0].mxu0 %v937
    %v976 = vpop.f32.mrb[0].mxu0
    %v977 = vadd.f32 0.0, %v976
    %v978 = vpop.f32.mrb[0].mxu0
    %v979 = vpop.f32.mrb[0].mxu0
    %v980 = vadd.f32 0.0, %v979
    %v981 = vpop.f32.mrb[0].mxu0
    %982 = vdwg.mxu0
    %v983 = vadd.f32 %v879, %v977
    %v984 = vadd.f32 %v882, %v980
    %985 = vrot.lane.b32.xlu0 %v94, 40
    %v986 = vpop.permute.xlu0 %985
    %v989 = vsel %vm503, %v683, 0
    %991 = vmatprep.subr.bf16.mxu0 0
    %992 = vmatpush1.bf16.msra.mxu0 %v986
    %993 = vmatprep.subr.bf16.mxu0 0
    %994 = vmatpush1.bf16.msra.mxu0 0
    %995 = vmatprep.subr.bf16.mxu0 0
    %996 = vmatpush1.bf16.msra.mxu0 0
    %997 = vmatprep.subr.bf16.mxu0 0
    %998 = vmatpush1.bf16.msra.mxu0 0
    %999 = vmatprep.subr.bf16.mxu0 0
    %1000 = vmatpush1.bf16.msra.mxu0 0
    %1001 = vmatprep.subr.bf16.mxu0 0
    %1002 = vmatpush1.bf16.msra.mxu0 0
    %1003 = vmatprep.subr.bf16.mxu0 0
    %1004 = vmatpush1.bf16.msra.mxu0 0
    %1005 = vmatprep.subr.bf16.mxu0 0
    %1006 = vmatpush1.bf16.msra.mxu0 0
    %1007 = vmatprep.subr.bf16.mxu0 0
    %1008 = vmatpush1.bf16.msra.mxu0 0
    %1009 = vmatprep.subr.bf16.mxu0 0
    %1010 = vmatpush1.bf16.msra.mxu0 0
    %1011 = vmatprep.subr.bf16.mxu0 0
    %1012 = vmatpush1.bf16.msra.mxu0 0
    %1013 = vmatprep.subr.bf16.mxu0 0
    %1014 = vmatpush1.bf16.msra.mxu0 0
    %1015 = vmatprep.subr.bf16.mxu0 0
    %1016 = vmatpush1.bf16.msra.mxu0 0
    %1017 = vmatprep.subr.bf16.mxu0 0
    %1018 = vmatpush1.bf16.msra.mxu0 0
    %1019 = vmatprep.subr.bf16.mxu0 0
    %1020 = vmatpush1.bf16.msra.mxu0 0
    %1021 = vmatprep.subr.bf16.mxu0 0
    %1022 = vmatpush1.bf16.msra.mxu0 0
    %1023 = vmatprep.mubr.bf16.mxu0 0
    %1024 = vmatmul.mubr.bf16.gmra.mrb[0].mxu0 %v989
    %v1025 = vpop.f32.mrb[0].mxu0
    %v1026 = vadd.f32 0.0, %v1025
    %v1027 = vpop.f32.mrb[0].mxu0
    %v1028 = vpop.f32.mrb[0].mxu0
    %v1029 = vadd.f32 0.0, %v1028
    %v1030 = vpop.f32.mrb[0].mxu0
    %1031 = vdwg.mxu0
    %v1032 = vpack.c.bf16 %v1029, %v1026
    %v1033 = vpack.c.b16 %v33, %v33
    %1034 = vrot.lane.b32.xlu0 %v1033, 32
    %v1035 = vpop.permute.xlu0 %1034
    %v1037 = vsel %vm99, %v1032, 0
    %v1040 = vsel %vm790, %v1035, 0
    %1042 = vmatprep.subr.bf16.mxu0 0
    %1043 = vmatpush1.bf16.msra.mxu0 %v1040
    %1044 = vmatprep.subr.bf16.mxu0 0
    %1045 = vmatpush1.bf16.msra.mxu0 0
    %1046 = vmatprep.subr.bf16.mxu0 0
    %1047 = vmatpush1.bf16.msra.mxu0 0
    %1048 = vmatprep.subr.bf16.mxu0 0
    %1049 = vmatpush1.bf16.msra.mxu0 0
    %1050 = vmatprep.subr.bf16.mxu0 0
    %1051 = vmatpush1.bf16.msra.mxu0 0
    %1052 = vmatprep.subr.bf16.mxu0 0
    %1053 = vmatpush1.bf16.msra.mxu0 0
    %1054 = vmatprep.subr.bf16.mxu0 0
    %1055 = vmatpush1.bf16.msra.mxu0 0
    %1056 = vmatprep.subr.bf16.mxu0 0
    %1057 = vmatpush1.bf16.msra.mxu0 0
    %1058 = vmatprep.subr.bf16.mxu0 0
    %1059 = vmatpush1.bf16.msra.mxu0 0
    %1060 = vmatprep.subr.bf16.mxu0 0
    %1061 = vmatpush1.bf16.msra.mxu0 0
    %1062 = vmatprep.subr.bf16.mxu0 0
    %1063 = vmatpush1.bf16.msra.mxu0 0
    %1064 = vmatprep.subr.bf16.mxu0 0
    %1065 = vmatpush1.bf16.msra.mxu0 0
    %1066 = vmatprep.subr.bf16.mxu0 0
    %1067 = vmatpush1.bf16.msra.mxu0 0
    %1068 = vmatprep.subr.bf16.mxu0 0
    %1069 = vmatpush1.bf16.msra.mxu0 0
    %1070 = vmatprep.subr.bf16.mxu0 0
    %1071 = vmatpush1.bf16.msra.mxu0 0
    %1072 = vmatprep.subr.bf16.mxu0 0
    %1073 = vmatpush1.bf16.msra.mxu0 0
    %1074 = vmatprep.mubr.bf16.mxu0 0
    %1075 = vmatmul.mubr.bf16.gmra.mrb[0].mxu0 %v1037
    %v1076 = vpop.f32.mrb[0].mxu0
    %v1077 = vadd.f32 0.0, %v1076
    %v1078 = vpop.f32.mrb[0].mxu0
    %v1079 = vpop.f32.mrb[0].mxu0
    %v1080 = vadd.f32 0.0, %v1079
    %v1081 = vpop.f32.mrb[0].mxu0
    %1082 = vdwg.mxu0
    %v1083 = vadd.f32 %v983, %v1077
    %v1084 = vadd.f32 %v984, %v1080
    %1085 = vrot.lane.b32.xlu0 %v95, 64
    %v1086 = vpop.permute.xlu0 %1085
    %v1089 = vsel %vm503, %v684, 0
    %1091 = vmatprep.subr.bf16.mxu0 0
    %1092 = vmatpush1.bf16.msra.mxu0 %v1086
    %1093 = vmatprep.subr.bf16.mxu0 0
    %1094 = vmatpush1.bf16.msra.mxu0 0
    %1095 = vmatprep.subr.bf16.mxu0 0
    %1096 = vmatpush1.bf16.msra.mxu0 0
    %1097 = vmatprep.subr.bf16.mxu0 0
    %1098 = vmatpush1.bf16.msra.mxu0 0
    %1099 = vmatprep.subr.bf16.mxu0 0
    %1100 = vmatpush1.bf16.msra.mxu0 0
    %1101 = vmatprep.subr.bf16.mxu0 0
    %1102 = vmatpush1.bf16.msra.mxu0 0
    %1103 = vmatprep.subr.bf16.mxu0 0
    %1104 = vmatpush1.bf16.msra.mxu0 0
    %1105 = vmatprep.subr.bf16.mxu0 0
    %1106 = vmatpush1.bf16.msra.mxu0 0
    %1107 = vmatprep.subr.bf16.mxu0 0
    %1108 = vmatpush1.bf16.msra.mxu0 0
    %1109 = vmatprep.subr.bf16.mxu0 0
    %1110 = vmatpush1.bf16.msra.mxu0 0
    %1111 = vmatprep.subr.bf16.mxu0 0
    %1112 = vmatpush1.bf16.msra.mxu0 0
    %1113 = vmatprep.subr.bf16.mxu0 0
    %1114 = vmatpush1.bf16.msra.mxu0 0
    %1115 = vmatprep.subr.bf16.mxu0 0
    %1116 = vmatpush1.bf16.msra.mxu0 0
    %1117 = vmatprep.subr.bf16.mxu0 0
    %1118 = vmatpush1.bf16.msra.mxu0 0
    %1119 = vmatprep.subr.bf16.mxu0 0
    %1120 = vmatpush1.bf16.msra.mxu0 0
    %1121 = vmatprep.subr.bf16.mxu0 0
    %1122 = vmatpush1.bf16.msra.mxu0 0
    %1123 = vmatprep.mubr.bf16.mxu0 0
    %1124 = vmatmul.mubr.bf16.gmra.mrb[0].mxu0 %v1089
    %v1125 = vpop.f32.mrb[0].mxu0
    %v1126 = vadd.f32 0.0, %v1125
    %v1127 = vpop.f32.mrb[0].mxu0
    %v1128 = vpop.f32.mrb[0].mxu0
    %v1129 = vadd.f32 0.0, %v1128
    %v1130 = vpop.f32.mrb[0].mxu0
    %1131 = vdwg.mxu0
    %v1132 = vpack.c.bf16 %v1129, %v1126
    %1133 = vrot.lane.b32.xlu0 %v95, 56
    %v1134 = vpop.permute.xlu0 %1133
    %v1137 = vsel %vm503, %v685, 0
    %1139 = vmatprep.subr.bf16.mxu0 0
    %1140 = vmatpush1.bf16.msra.mxu0 %v1134
    %1141 = vmatprep.subr.bf16.mxu0 0
    %1142 = vmatpush1.bf16.msra.mxu0 0
    %1143 = vmatprep.subr.bf16.mxu0 0
    %1144 = vmatpush1.bf16.msra.mxu0 0
    %1145 = vmatprep.subr.bf16.mxu0 0
    %1146 = vmatpush1.bf16.msra.mxu0 0
    %1147 = vmatprep.subr.bf16.mxu0 0
    %1148 = vmatpush1.bf16.msra.mxu0 0
    %1149 = vmatprep.subr.bf16.mxu0 0
    %1150 = vmatpush1.bf16.msra.mxu0 0
    %1151 = vmatprep.subr.bf16.mxu0 0
    %1152 = vmatpush1.bf16.msra.mxu0 0
    %1153 = vmatprep.subr.bf16.mxu0 0
    %1154 = vmatpush1.bf16.msra.mxu0 0
    %1155 = vmatprep.subr.bf16.mxu0 0
    %1156 = vmatpush1.bf16.msra.mxu0 0
    %1157 = vmatprep.subr.bf16.mxu0 0
    %1158 = vmatpush1.bf16.msra.mxu0 0
    %1159 = vmatprep.subr.bf16.mxu0 0
    %1160 = vmatpush1.bf16.msra.mxu0 0
    %1161 = vmatprep.subr.bf16.mxu0 0
    %1162 = vmatpush1.bf16.msra.mxu0 0
    %1163 = vmatprep.subr.bf16.mxu0 0
    %1164 = vmatpush1.bf16.msra.mxu0 0
    %1165 = vmatprep.subr.bf16.mxu0 0
    %1166 = vmatpush1.bf16.msra.mxu0 0
    %1167 = vmatprep.subr.bf16.mxu0 0
    %1168 = vmatpush1.bf16.msra.mxu0 0
    %1169 = vmatprep.subr.bf16.mxu0 0
    %1170 = vmatpush1.bf16.msra.mxu0 0
    %1171 = vmatprep.mubr.bf16.mxu0 0
    %1172 = vmatmul.mubr.bf16.gmra.mrb[0].mxu0 %v1137
    %v1173 = vpop.f32.mrb[0].mxu0
    %v1174 = vadd.f32 0.0, %v1173
    %v1175 = vpop.f32.mrb[0].mxu0
    %v1176 = vpop.f32.mrb[0].mxu0
    %v1177 = vadd.f32 0.0, %v1176
    %v1178 = vpop.f32.mrb[0].mxu0
    %1179 = vdwg.mxu0
    %v1180 = vpack.c.bf16 %v1177, %v1174
    %v1182 = vsel %vm99, %v1180, 0
    %1184 = vmatprep.subr.bf16.mxu0 0
    %1185 = vmatpush1.bf16.msra.mxu0 %v792
    %1186 = vmatprep.subr.bf16.mxu0 0
    %1187 = vmatpush1.bf16.msra.mxu0 0
    %1188 = vmatprep.subr.bf16.mxu0 0
    %1189 = vmatpush1.bf16.msra.mxu0 0
    %1190 = vmatprep.subr.bf16.mxu0 0
    %1191 = vmatpush1.bf16.msra.mxu0 0
    %1192 = vmatprep.subr.bf16.mxu0 0
    %1193 = vmatpush1.bf16.msra.mxu0 0
    %1194 = vmatprep.subr.bf16.mxu0 0
    %1195 = vmatpush1.bf16.msra.mxu0 0
    %1196 = vmatprep.subr.bf16.mxu0 0
    %1197 = vmatpush1.bf16.msra.mxu0 0
    %1198 = vmatprep.subr.bf16.mxu0 0
    %1199 = vmatpush1.bf16.msra.mxu0 0
    %1200 = vmatprep.subr.bf16.mxu0 0
    %1201 = vmatpush1.bf16.msra.mxu0 0
    %1202 = vmatprep.subr.bf16.mxu0 0
    %1203 = vmatpush1.bf16.msra.mxu0 0
    %1204 = vmatprep.subr.bf16.mxu0 0
    %1205 = vmatpush1.bf16.msra.mxu0 0
    %1206 = vmatprep.subr.bf16.mxu0 0
    %1207 = vmatpush1.bf16.msra.mxu0 0
    %1208 = vmatprep.subr.bf16.mxu0 0
    %1209 = vmatpush1.bf16.msra.mxu0 0
    %1210 = vmatprep.subr.bf16.mxu0 0
    %1211 = vmatpush1.bf16.msra.mxu0 0
    %1212 = vmatprep.subr.bf16.mxu0 0
    %1213 = vmatpush1.bf16.msra.mxu0 0
    %1214 = vmatprep.subr.bf16.mxu0 0
    %1215 = vmatpush1.bf16.msra.mxu0 0
    %1216 = vmatprep.mubr.bf16.mxu0 0
    %1217 = vmatmul.mubr.bf16.gmra.mrb[0].mxu0 %v1182
    %v1218 = vpop.f32.mrb[0].mxu0
    %v1219 = vadd.f32 0.0, %v1218
    %v1220 = vpop.f32.mrb[0].mxu0
    %v1221 = vpop.f32.mrb[0].mxu0
    %v1222 = vadd.f32 0.0, %v1221
    %v1223 = vpop.f32.mrb[0].mxu0
    %1224 = vdwg.mxu0
    %v1226 = vsel %vm99, %v1132, 0
    %1228 = vmatprep.subr.bf16.mxu0 0
    %1229 = vmatpush1.bf16.msra.mxu0 %v842
    %1230 = vmatprep.subr.bf16.mxu0 0
    %1231 = vmatpush1.bf16.msra.mxu0 0
    %1232 = vmatprep.subr.bf16.mxu0 0
    %1233 = vmatpush1.bf16.msra.mxu0 0
    %1234 = vmatprep.subr.bf16.mxu0 0
    %1235 = vmatpush1.bf16.msra.mxu0 0
    %1236 = vmatprep.subr.bf16.mxu0 0
    %1237 = vmatpush1.bf16.msra.mxu0 0
    %1238 = vmatprep.subr.bf16.mxu0 0
    %1239 = vmatpush1.bf16.msra.mxu0 0
    %1240 = vmatprep.subr.bf16.mxu0 0
    %1241 = vmatpush1.bf16.msra.mxu0 0
    %1242 = vmatprep.subr.bf16.mxu0 0
    %1243 = vmatpush1.bf16.msra.mxu0 0
    %1244 = vmatprep.subr.bf16.mxu0 0
    %1245 = vmatpush1.bf16.msra.mxu0 0
    %1246 = vmatprep.subr.bf16.mxu0 0
    %1247 = vmatpush1.bf16.msra.mxu0 0
    %1248 = vmatprep.subr.bf16.mxu0 0
    %1249 = vmatpush1.bf16.msra.mxu0 0
    %1250 = vmatprep.subr.bf16.mxu0 0
    %1251 = vmatpush1.bf16.msra.mxu0 0
    %1252 = vmatprep.subr.bf16.mxu0 0
    %1253 = vmatpush1.bf16.msra.mxu0 0
    %1254 = vmatprep.subr.bf16.mxu0 0
    %1255 = vmatpush1.bf16.msra.mxu0 0
    %1256 = vmatprep.subr.bf16.mxu0 0
    %1257 = vmatpush1.bf16.msra.mxu0 0
    %1258 = vmatprep.subr.bf16.mxu0 0
    %1259 = vmatpush1.bf16.msra.mxu0 0
    %1260 = vmatprep.mubr.bf16.mxu0 0
    %1261 = vmatmul.mubr.bf16.gmra.mrb[0].mxu0 %v1226
    %v1262 = vpop.f32.mrb[0].mxu0
    %v1263 = vadd.f32 %v1219, %v1262
    %v1264 = vpop.f32.mrb[0].mxu0
    %v1265 = vpop.f32.mrb[0].mxu0
    %v1266 = vadd.f32 %v1222, %v1265
    %v1267 = vpop.f32.mrb[0].mxu0
    %1268 = vdwg.mxu0
    %1269 = vrot.lane.b32.xlu0 %v95, 48
    %v1270 = vpop.permute.xlu0 %1269
    %v1273 = vsel %vm503, %v686, 0
    %1275 = vmatprep.subr.bf16.mxu0 0
    %1276 = vmatpush1.bf16.msra.mxu0 %v1270
    %1277 = vmatprep.subr.bf16.mxu0 0
    %1278 = vmatpush1.bf16.msra.mxu0 0
    %1279 = vmatprep.subr.bf16.mxu0 0
    %1280 = vmatpush1.bf16.msra.mxu0 0
    %1281 = vmatprep.subr.bf16.mxu0 0
    %1282 = vmatpush1.bf16.msra.mxu0 0
    %1283 = vmatprep.subr.bf16.mxu0 0
    %1284 = vmatpush1.bf16.msra.mxu0 0
    %1285 = vmatprep.subr.bf16.mxu0 0
    %1286 = vmatpush1.bf16.msra.mxu0 0
    %1287 = vmatprep.subr.bf16.mxu0 0
    %1288 = vmatpush1.bf16.msra.mxu0 0
    %1289 = vmatprep.subr.bf16.mxu0 0
    %1290 = vmatpush1.bf16.msra.mxu0 0
    %1291 = vmatprep.subr.bf16.mxu0 0
    %1292 = vmatpush1.bf16.msra.mxu0 0
    %1293 = vmatprep.subr.bf16.mxu0 0
    %1294 = vmatpush1.bf16.msra.mxu0 0
    %1295 = vmatprep.subr.bf16.mxu0 0
    %1296 = vmatpush1.bf16.msra.mxu0 0
    %1297 = vmatprep.subr.bf16.mxu0 0
    %1298 = vmatpush1.bf16.msra.mxu0 0
    %1299 = vmatprep.subr.bf16.mxu0 0
    %1300 = vmatpush1.bf16.msra.mxu0 0
    %1301 = vmatprep.subr.bf16.mxu0 0
    %1302 = vmatpush1.bf16.msra.mxu0 0
    %1303 = vmatprep.subr.bf16.mxu0 0
    %1304 = vmatpush1.bf16.msra.mxu0 0
    %1305 = vmatprep.subr.bf16.mxu0 0
    %1306 = vmatpush1.bf16.msra.mxu0 0
    %1307 = vmatprep.mubr.bf16.mxu0 0
    %1308 = vmatmul.mubr.bf16.gmra.mrb[0].mxu0 %v1273
    %v1309 = vpop.f32.mrb[0].mxu0
    %v1310 = vadd.f32 0.0, %v1309
    %v1311 = vpop.f32.mrb[0].mxu0
    %v1312 = vpop.f32.mrb[0].mxu0
    %v1313 = vadd.f32 0.0, %v1312
    %v1314 = vpop.f32.mrb[0].mxu0
    %1315 = vdwg.mxu0
    %v1316 = vpack.c.bf16 %v1313, %v1310
    %v1318 = vsel %vm99, %v1316, 0
    %1320 = vmatprep.subr.bf16.mxu0 0
    %1321 = vmatpush1.bf16.msra.mxu0 %v940
    %1322 = vmatprep.subr.bf16.mxu0 0
    %1323 = vmatpush1.bf16.msra.mxu0 0
    %1324 = vmatprep.subr.bf16.mxu0 0
    %1325 = vmatpush1.bf16.msra.mxu0 0
    %1326 = vmatprep.subr.bf16.mxu0 0
    %1327 = vmatpush1.bf16.msra.mxu0 0
    %1328 = vmatprep.subr.bf16.mxu0 0
    %1329 = vmatpush1.bf16.msra.mxu0 0
    %1330 = vmatprep.subr.bf16.mxu0 0
    %1331 = vmatpush1.bf16.msra.mxu0 0
    %1332 = vmatprep.subr.bf16.mxu0 0
    %1333 = vmatpush1.bf16.msra.mxu0 0
    %1334 = vmatprep.subr.bf16.mxu0 0
    %1335 = vmatpush1.bf16.msra.mxu0 0
    %1336 = vmatprep.subr.bf16.mxu0 0
    %1337 = vmatpush1.bf16.msra.mxu0 0
    %1338 = vmatprep.subr.bf16.mxu0 0
    %1339 = vmatpush1.bf16.msra.mxu0 0
    %1340 = vmatprep.subr.bf16.mxu0 0
    %1341 = vmatpush1.bf16.msra.mxu0 0
    %1342 = vmatprep.subr.bf16.mxu0 0
    %1343 = vmatpush1.bf16.msra.mxu0 0
    %1344 = vmatprep.subr.bf16.mxu0 0
    %1345 = vmatpush1.bf16.msra.mxu0 0
    %1346 = vmatprep.subr.bf16.mxu0 0
    %1347 = vmatpush1.bf16.msra.mxu0 0
    %1348 = vmatprep.subr.bf16.mxu0 0
    %1349 = vmatpush1.bf16.msra.mxu0 0
    %1350 = vmatprep.subr.bf16.mxu0 0
    %1351 = vmatpush1.bf16.msra.mxu0 0
    %1352 = vmatprep.mubr.bf16.mxu0 0
    %1353 = vmatmul.mubr.bf16.gmra.mrb[0].mxu0 %v1318
    %v1354 = vpop.f32.mrb[0].mxu0
    %v1355 = vadd.f32 0.0, %v1354
    %v1356 = vpop.f32.mrb[0].mxu0
    %v1357 = vpop.f32.mrb[0].mxu0
    %v1358 = vadd.f32 0.0, %v1357
    %v1359 = vpop.f32.mrb[0].mxu0
    %1360 = vdwg.mxu0
    %v1361 = vadd.f32 %v1263, %v1355
    %v1362 = vadd.f32 %v1266, %v1358
    %1363 = vrot.lane.b32.xlu0 %v95, 40
    %v1364 = vpop.permute.xlu0 %1363
    %v1367 = vsel %vm503, %v687, 0
    %1369 = vmatprep.subr.bf16.mxu0 0
    %1370 = vmatpush1.bf16.msra.mxu0 %v1364
    %1371 = vmatprep.subr.bf16.mxu0 0
    %1372 = vmatpush1.bf16.msra.mxu0 0
    %1373 = vmatprep.subr.bf16.mxu0 0
    %1374 = vmatpush1.bf16.msra.mxu0 0
    %1375 = vmatprep.subr.bf16.mxu0 0
    %1376 = vmatpush1.bf16.msra.mxu0 0
    %1377 = vmatprep.subr.bf16.mxu0 0
    %1378 = vmatpush1.bf16.msra.mxu0 0
    %1379 = vmatprep.subr.bf16.mxu0 0
    %1380 = vmatpush1.bf16.msra.mxu0 0
    %1381 = vmatprep.subr.bf16.mxu0 0
    %1382 = vmatpush1.bf16.msra.mxu0 0
    %1383 = vmatprep.subr.bf16.mxu0 0
    %1384 = vmatpush1.bf16.msra.mxu0 0
    %1385 = vmatprep.subr.bf16.mxu0 0
    %1386 = vmatpush1.bf16.msra.mxu0 0
    %1387 = vmatprep.subr.bf16.mxu0 0
    %1388 = vmatpush1.bf16.msra.mxu0 0
    %1389 = vmatprep.subr.bf16.mxu0 0
    %1390 = vmatpush1.bf16.msra.mxu0 0
    %1391 = vmatprep.subr.bf16.mxu0 0
    %1392 = vmatpush1.bf16.msra.mxu0 0
    %1393 = vmatprep.subr.bf16.mxu0 0
    %1394 = vmatpush1.bf16.msra.mxu0 0
    %1395 = vmatprep.subr.bf16.mxu0 0
    %1396 = vmatpush1.bf16.msra.mxu0 0
    %1397 = vmatprep.subr.bf16.mxu0 0
    %1398 = vmatpush1.bf16.msra.mxu0 0
    %1399 = vmatprep.subr.bf16.mxu0 0
    %1400 = vmatpush1.bf16.msra.mxu0 0
    %1401 = vmatprep.mubr.bf16.mxu0 0
    %1402 = vmatmul.mubr.bf16.gmra.mrb[0].mxu0 %v1367
    %v1403 = vpop.f32.mrb[0].mxu0
    %v1404 = vadd.f32 0.0, %v1403
    %v1405 = vpop.f32.mrb[0].mxu0
    %v1406 = vpop.f32.mrb[0].mxu0
    %v1407 = vadd.f32 0.0, %v1406
    %v1408 = vpop.f32.mrb[0].mxu0
    %1409 = vdwg.mxu0
    %v1410 = vpack.c.bf16 %v1407, %v1404
    %v1412 = vsel %vm99, %v1410, 0
    %1414 = vmatprep.subr.bf16.mxu0 0
    %1415 = vmatpush1.bf16.msra.mxu0 %v1040
    %1416 = vmatprep.subr.bf16.mxu0 0
    %1417 = vmatpush1.bf16.msra.mxu0 0
    %1418 = vmatprep.subr.bf16.mxu0 0
    %1419 = vmatpush1.bf16.msra.mxu0 0
    %1420 = vmatprep.subr.bf16.mxu0 0
    %1421 = vmatpush1.bf16.msra.mxu0 0
    %1422 = vmatprep.subr.bf16.mxu0 0
    %1423 = vmatpush1.bf16.msra.mxu0 0
    %1424 = vmatprep.subr.bf16.mxu0 0
    %1425 = vmatpush1.bf16.msra.mxu0 0
    %1426 = vmatprep.subr.bf16.mxu0 0
    %1427 = vmatpush1.bf16.msra.mxu0 0
    %1428 = vmatprep.subr.bf16.mxu0 0
    %1429 = vmatpush1.bf16.msra.mxu0 0
    %1430 = vmatprep.subr.bf16.mxu0 0
    %1431 = vmatpush1.bf16.msra.mxu0 0
    %1432 = vmatprep.subr.bf16.mxu0 0
    %1433 = vmatpush1.bf16.msra.mxu0 0
    %1434 = vmatprep.subr.bf16.mxu0 0
    %1435 = vmatpush1.bf16.msra.mxu0 0
    %1436 = vmatprep.subr.bf16.mxu0 0
    %1437 = vmatpush1.bf16.msra.mxu0 0
    %1438 = vmatprep.subr.bf16.mxu0 0
    %1439 = vmatpush1.bf16.msra.mxu0 0
    %1440 = vmatprep.subr.bf16.mxu0 0
    %1441 = vmatpush1.bf16.msra.mxu0 0
    %1442 = vmatprep.subr.bf16.mxu0 0
    %1443 = vmatpush1.bf16.msra.mxu0 0
    %1444 = vmatprep.subr.bf16.mxu0 0
    %1445 = vmatpush1.bf16.msra.mxu0 0
    %1446 = vmatprep.mubr.bf16.mxu0 0
    %1447 = vmatmul.mubr.bf16.gmra.mrb[0].mxu0 %v1412
    %v1448 = vpop.f32.mrb[0].mxu0
    %v1449 = vadd.f32 0.0, %v1448
    %v1450 = vpop.f32.mrb[0].mxu0
    %v1451 = vpop.f32.mrb[0].mxu0
    %v1452 = vadd.f32 0.0, %v1451
    %v1453 = vpop.f32.mrb[0].mxu0
    %1454 = vdwg.mxu0
    %v1455 = vadd.f32 %v1361, %v1449
    %v1456 = vadd.f32 %v1362, %v1452
    %v1457 = vld [vmem:[%s2] sm:$0xff]
    %v1458 = vld [vmem:[%s2 + $0x8] sm:$0xff]
    %v1459 = vld [vmem:[%s2 + $0x10] sm:$0xff]
    %v1460 = vld [vmem:[%s2 + $0x18] sm:$0xff]
    %v1461 = vld [vmem:[%s2 + $0x20] sm:$0xff]
    %v1462 = vld [vmem:[%s2 + $0x28] sm:$0xff]
    %v1463 = vlaneseq
    %v1464 = vshrl.u32 %v1463, 7
    %v1465 = vsub.s32 0, %v1464
    %v1466 = vrot.slane %v1462, %v1465
    %v1467 = vadd.f32 %v1083, %v1466
    %v1468 = vadd.f32 %v1084, %v1466
    %v1469 = vadd.f32 %v1455, %v1466
    %v1470 = vadd.f32 %v1456, %v1466
    %v1471 = vpack.c.bf16 %v1468, %v1467
    %v1472 = vpack.c.bf16 %v1470, %v1469
    %v1473 = vpack.c.bf16 %v1458, %v1457
    %v1474 = vpack.c.bf16 %v1460, %v1459
    %v1475 = vlaneseq
    %v1476 = vshrl.u32 %v1475, 7
    %v1477 = vsub.s32 1, %v1476
    %v1478 = vrot.slane %v1462, %v1477
    %v1480 = vsel %vm38, %v1471, 0
    %v1483 = vsel %vm38, %v1472, 0
    %1485 = vmatprep.subr.bf16.mxu0 0
    %1486 = vmatpush1.bf16.msra.mxu0 %v1473
    %1487 = vmatprep.subr.bf16.mxu0 0
    %1488 = vmatpush1.bf16.msra.mxu0 %v1474
    %1489 = vmatprep.subr.bf16.mxu0 0
    %1490 = vmatpush1.bf16.msra.mxu0 0
    %1491 = vmatprep.subr.bf16.mxu0 0
    %1492 = vmatpush1.bf16.msra.mxu0 0
    %1493 = vmatprep.subr.bf16.mxu0 0
    %1494 = vmatpush1.bf16.msra.mxu0 0
    %1495 = vmatprep.subr.bf16.mxu0 0
    %1496 = vmatpush1.bf16.msra.mxu0 0
    %1497 = vmatprep.subr.bf16.mxu0 0
    %1498 = vmatpush1.bf16.msra.mxu0 0
    %1499 = vmatprep.subr.bf16.mxu0 0
    %1500 = vmatpush1.bf16.msra.mxu0 0
    %1501 = vmatprep.subr.bf16.mxu0 0
    %1502 = vmatpush1.bf16.msra.mxu0 0
    %1503 = vmatprep.subr.bf16.mxu0 0
    %1504 = vmatpush1.bf16.msra.mxu0 0
    %1505 = vmatprep.subr.bf16.mxu0 0
    %1506 = vmatpush1.bf16.msra.mxu0 0
    %1507 = vmatprep.subr.bf16.mxu0 0
    %1508 = vmatpush1.bf16.msra.mxu0 0
    %1509 = vmatprep.subr.bf16.mxu0 0
    %1510 = vmatpush1.bf16.msra.mxu0 0
    %1511 = vmatprep.subr.bf16.mxu0 0
    %1512 = vmatpush1.bf16.msra.mxu0 0
    %1513 = vmatprep.subr.bf16.mxu0 0
    %1514 = vmatpush1.bf16.msra.mxu0 0
    %1515 = vmatprep.subr.bf16.mxu0 0
    %1516 = vmatpush1.bf16.msra.mxu0 0
    %1517 = vmatprep.mubr.bf16.mxu0 0
    %1518 = vmatmul.mubr.bf16.gmra.mrb[0].mxu0 %v1480
    %v1519 = vpop.f32.mrb[0].mxu0
    %v1520 = vadd.f32 %v1478, %v1519
    %v1521 = vpop.f32.mrb[0].mxu0
    %v1522 = vpop.f32.mrb[0].mxu0
    %v1523 = vadd.f32 %v1478, %v1522
    %v1524 = vpop.f32.mrb[0].mxu0
    %1525 = vmatprep.mubr.bf16.mxu0 0
    %1526 = vmatmul.mubr.bf16.gmra.mrb[0].mxu0 %v1483
    %v1527 = vpop.f32.mrb[0].mxu0
    %v1528 = vadd.f32 %v1478, %v1527
    %v1529 = vpop.f32.mrb[0].mxu0
    %v1530 = vpop.f32.mrb[0].mxu0
    %v1531 = vadd.f32 %v1478, %v1530
    %v1532 = vpop.f32.mrb[0].mxu0
    %1533 = vdwg.mxu0
    %v1534 = vmul.f32 %v1520, 0.5
    %v1535 = vmul.f32 %v1523, 0.5
    %v1536 = vmul.f32 %v1528, 0.5
    %v1537 = vmul.f32 %v1531, 0.5
    %v1538 = vmul.f32 %v1520, 0.70710677
    %v1539 = vmul.f32 %v1523, 0.70710677
    %v1540 = vmul.f32 %v1528, 0.70710677
    %v1541 = vmul.f32 %v1531, 0.70710677
    %v1542 = verf.f32.pop %v1538
    %v1543 = verf.f32.pop %v1539
    %v1544 = verf.f32.pop %v1540
    %v1545 = verf.f32.pop %v1541
    %v1546 = vadd.f32 %v1542, 1.0
    %v1547 = vadd.f32 %v1543, 1.0
    %v1548 = vadd.f32 %v1544, 1.0
    %v1549 = vadd.f32 %v1545, 1.0
    %v1550 = vmul.f32 %v1534, %v1546
    %v1551 = vmul.f32 %v1535, %v1547
    %v1552 = vmul.f32 %v1536, %v1548
    %v1553 = vmul.f32 %v1537, %v1549
    %v1554 = vpack.c.bf16 %v1551, %v1550
    %v1555 = vpack.c.bf16 %v1553, %v1552
    %v1556 = vpack.c.bf16 %v1461, %v1461
    %v1557 = vlaneseq
    %v1558 = vshrl.u32 %v1557, 7
    %v1559 = vsub.s32 2, %v1558
    %v1560 = vrot.slane %v1462, %v1559
    %v1562 = vsel %vm99, %v1554, 0
    %v1565 = vsel %vm99, %v1555, 0
    %v1568 = vsel %vm790, %v1556, 0
    %1570 = vmatprep.subr.bf16.mxu0 0
    %1571 = vmatpush1.bf16.msra.mxu0 %v1568
    %1572 = vmatprep.subr.bf16.mxu0 0
    %1573 = vmatpush1.bf16.msra.mxu0 0
    %1574 = vmatprep.subr.bf16.mxu0 0
    %1575 = vmatpush1.bf16.msra.mxu0 0
    %1576 = vmatprep.subr.bf16.mxu0 0
    %1577 = vmatpush1.bf16.msra.mxu0 0
    %1578 = vmatprep.subr.bf16.mxu0 0
    %1579 = vmatpush1.bf16.msra.mxu0 0
    %1580 = vmatprep.subr.bf16.mxu0 0
    %1581 = vmatpush1.bf16.msra.mxu0 0
    %1582 = vmatprep.subr.bf16.mxu0 0
    %1583 = vmatpush1.bf16.msra.mxu0 0
    %1584 = vmatprep.subr.bf16.mxu0 0
    %1585 = vmatpush1.bf16.msra.mxu0 0
    %1586 = vmatprep.subr.bf16.mxu0 0
    %1587 = vmatpush1.bf16.msra.mxu0 0
    %1588 = vmatprep.subr.bf16.mxu0 0
    %1589 = vmatpush1.bf16.msra.mxu0 0
    %1590 = vmatprep.subr.bf16.mxu0 0
    %1591 = vmatpush1.bf16.msra.mxu0 0
    %1592 = vmatprep.subr.bf16.mxu0 0
    %1593 = vmatpush1.bf16.msra.mxu0 0
    %1594 = vmatprep.subr.bf16.mxu0 0
    %1595 = vmatpush1.bf16.msra.mxu0 0
    %1596 = vmatprep.subr.bf16.mxu0 0
    %1597 = vmatpush1.bf16.msra.mxu0 0
    %1598 = vmatprep.subr.bf16.mxu0 0
    %1599 = vmatpush1.bf16.msra.mxu0 0
    %1600 = vmatprep.subr.bf16.mxu0 0
    %1601 = vmatpush1.bf16.msra.mxu0 0
    %1602 = vmatprep.mubr.bf16.mxu0 0
    %1603 = vmatmul.mubr.bf16.gmra.mrb[0].mxu0 %v1562
    %v1604 = vpop.f32.mrb[0].mxu0
    %v1605 = vadd.f32 %v1560, %v1604
    %v1606 = vpop.f32.mrb[0].mxu0
    %v1607 = vpop.f32.mrb[0].mxu0
    %v1608 = vadd.f32 %v1560, %v1607
    %v1609 = vpop.f32.mrb[0].mxu0
    %1610 = vmatprep.mubr.bf16.mxu0 0
    %1611 = vmatmul.mubr.bf16.gmra.mrb[0].mxu0 %v1565
    %v1612 = vpop.f32.mrb[0].mxu0
    %v1613 = vadd.f32 %v1560, %v1612
    %v1614 = vpop.f32.mrb[0].mxu0
    %v1615 = vpop.f32.mrb[0].mxu0
    %v1616 = vadd.f32 %v1560, %v1615
    %v1617 = vpop.f32.mrb[0].mxu0
    %1618 = vdwg.mxu0
    %v1619 = vadd.f32 %v1467, %v1605
    %v1620 = vadd.f32 %v1468, %v1608
    %v1621 = vadd.f32 %v1469, %v1613
    %v1622 = vadd.f32 %v1470, %v1616
    %1623 = vst.msk [vmem:[#allocation2] sm:$0xff] %vm38, %v1619
    %1624 = vst.msk [vmem:[#allocation2 + $0x8] sm:$0xff] %vm38, %v1620
    %1625 = vst.msk [vmem:[#allocation2 + $0x10] sm:$0xff] %vm38, %v1621
    %1626 = vst.msk [vmem:[#allocation2 + $0x18] sm:$0xff] %vm38, %v1622
    // Predicated region
    $region14: #{tpu_custom_call.1} parent=1 // pred_check
      _
    $region15: #{tpu_custom_call.1} parent=1 // pred_check_branch
      %1628 = sbr.rel (0) target = $region17
    $region16: #{tpu_custom_call.1} parent=1 // pred_region
      %s1630 = ssub.s32 512, 512
      %1631 = vsyncadd [#allocation3], %s1630
      %s1632 = sshll.u32 [#allocation2], 4
      %s1633 = int_to_ptr.vmem [resolvable:$true] %s1632
      %1638 = dma.vmem_to_hbm [thread:$0]  %s1633, 512, %s3, [#allocation3], 128, 128, 8
    $region17: #{tpu_custom_call.1} parent=1 // pred_fallthru
      _
    // Predicated region
    $region18: #{tpu_custom_call.1} parent=1 // pred_check
      _
    $region19: #{tpu_custom_call.1} parent=1 // pred_check_branch
      %1640 = sbr.rel (0) target = $region21
    $region20: #{tpu_custom_call.1} parent=1 // pred_region
      %1641 = dma.done [#allocation3], 512
    $region21: #{tpu_custom_call.1} parent=1 // pred_fallthru
      _
    %1642 = vsyncpa [#allocation3], 1

</llo_original>
